<compile_context>
chip_gen: v5e
topology: v5e:2x2
jax: 0.10.0
libtpu: 0.0.40
codegen_flags: <defaults>
</compile_context>

<pallas_src>
import jax
import jax.numpy as jnp
import numpy as np
from jax.experimental import pallas as pl
from jax.experimental.pallas import tpu as pltpu


# ----------------------------------------------------------------------------
# Synthetic "visual" backbone configuration (stem + layer1..layer4)
# ----------------------------------------------------------------------------
_LAYER_CFG = [
    # (name,   Cin, Cout, stride)
    ("stem",    3,    8,  1),
    ("layer1",  8,    8,  1),
    ("layer2",  8,   16,  2),
    ("layer3", 16,   32,  2),
    ("layer4", 32,   64,  2),
]
_KH = _KW = 3
_PAD = 1
_B_TILE = 8            # images per grid step = sublane dim of every tile


def init_params(key):
    """PyTorch-layout conv params: w (Cout, Cin, 3, 3), b (Cout,)."""
    params = {}
    for name, cin, cout, _ in _LAYER_CFG:
        key, kw_, kb_ = jax.random.split(key, 3)
        params[name] = {
            "w": 0.1 * jax.random.normal(kw_, (cout, cin, 3, 3), jnp.float32),
            "b": 0.01 * jax.random.normal(kb_, (cout,), jnp.float32),
        }
    return params


def _out_size(n, stride):
    return (n + 2 * _PAD - _KH) // stride + 1


def _layer_dims(h, w):
    dims = []
    h_in, w_in = h, w
    for name, cin, cout, stride in _LAYER_CFG:
        h_out, w_out = _out_size(h_in, stride), _out_size(w_in, stride)
        dims.append(dict(name=name, cin=cin, cout=cout, stride=stride,
                         h_in=h_in, w_in=w_in, h_out=h_out, w_out=w_out))
        h_in, w_in = h_out, w_out
    return dims


# ----------------------------------------------------------------------------
# One-time weight repack (init path, NOT per-call)
# ----------------------------------------------------------------------------
def _build_q_stacked(weight, w_in, w_out, stride):
    """Q (3*W_in*Cin, W_out*Cout): kernel-row-i weights with the COLUMN
    shift/stride/zero-pad folded in, stacked along K in kernel-row order.
    Matches the in-kernel lane concat of the three row-shifted views."""
    weight = np.asarray(weight, np.float32)            # (Cout, Cin, 3, 3)
    cout, cin, kh, kw = weight.shape
    qs = np.zeros((kh, w_in * cin, w_out * cout), np.float32)
    for i in range(kh):
        for wo in range(w_out):
            for j in range(kw):
                w = wo * stride - _PAD + j
                if 0 <= w < w_in:
                    qs[i, w * cin:(w + 1) * cin, wo * cout:(wo + 1) * cout] = \
                        weight[:, :, i, j].T           # (Cin, Cout)
    return qs.reshape(kh * w_in * cin, w_out * cout)


def pack_backbone(params, h, w):
    """Hoisted repack of all conv weights into the kernel's matmul form."""
    # TODO(synk): at real image resolutions the dense Q packing grows ~O(W^2);
    # switch to true 9x(Cin,Cout) weights + lane rolls and set vmem_limit_bytes.
    packs = []
    for d in _layer_dims(h, w):
        q = jnp.asarray(
            _build_q_stacked(params[d["name"]]["w"], d["w_in"], d["w_out"],
                             d["stride"]),
            jnp.bfloat16)                                        # (3*Win*Cin, Wo*Co)
        b = jnp.tile(jnp.asarray(params[d["name"]]["b"], jnp.float32),
                     d["w_out"]).reshape(1, d["w_out"] * d["cout"])  # (1, Wo*Co)
        packs.append((q, b))
    return packs


# ----------------------------------------------------------------------------
# Fused Pallas kernel: whole backbone for B_TILE images per grid step
# ----------------------------------------------------------------------------
def _make_kernel(dims, b_tile):
    n_layers = len(dims)

    def kernel(x_ref, *refs):
        w_refs = refs[:2 * n_layers]          # (q0, b0, q1, b1, ...)
        o_refs = refs[2 * n_layers:]          # layer1..layer4 hook outputs

        def pad_rows(y3d_bf, consumer):
            # Zero planes encode the conv's row zero-padding explicitly, so the
            # shifted views below never read out-of-range rows (review concern).
            wc = consumer["w_in"] * consumer["cin"]
            pad_bot = max(1, consumer["stride"] * consumer["h_out"] + 1
                          - consumer["h_in"])
            top = jnp.zeros((1, b_tile, wc), jnp.bfloat16)
            bot = jnp.zeros((pad_bot, b_tile, wc), jnp.bfloat16)
            return jnp.concatenate([top, y3d_bf, bot], axis=0)

        def conv3x3_relu(a_pad, q_ref, b_ref, d):
            # a_pad: (H_in + pads, b_tile, W_in*Cin) bf16, zero pad planes.
            h_out, stride = d["h_out"], d["stride"]
            wc = d["w_in"] * d["cin"]
            views = []
            for i in range(_KH):                       # unrolled, all static
                if stride == 1:
                    v = a_pad[i:i + h_out]                         # plane slice
                else:
                    v = a_pad[i:i + stride * h_out]
                    v = v.reshape(h_out, stride, b_tile, wc)[:, 0]  # plane select
                views.append(v)                        # (h_out, b_tile, wc)
            a_cat = jnp.concatenate(views, axis=-1)    # (h_out, b_tile, 3*wc)
            a2d = a_cat.reshape(h_out * b_tile, 3 * wc)   # zero-cost (b_tile==8)
            y = jnp.dot(a2d, q_ref[...],               # ONE MXU matmul / layer
                        preferred_element_type=jnp.float32)
            return jnp.maximum(y + b_ref[...], 0.0)    # bias + ReLU in f32

        a = pad_rows(x_ref[...], dims[0])              # stem input, bf16

        cap_idx = 0
        for li, d in enumerate(dims):
            y = conv3x3_relu(a, w_refs[2 * li], w_refs[2 * li + 1], d)
            y_bf = y.astype(jnp.bfloat16)              # single cast per layer
            if d["name"] != "stem":
                o_refs[cap_idx][0] = y_bf              # hook: layer1..layer4
                cap_idx += 1
            if li + 1 < n_layers:
                wc_out = d["w_out"] * d["cout"]
                a = pad_rows(y_bf.reshape(d["h_out"], b_tile, wc_out),
                             dims[li + 1])

    return kernel


def feature_extractor_forward(packs, x_nchw, b_tile=_B_TILE):
    """Mirrors FeatureExtractor.forward: runs encode_image's backbone and
    returns {0..3: layer_k output[0]} with each feature in CHW."""
    n, cin, h, w = x_nchw.shape
    dims = _layer_dims(h, w)
    assert cin == dims[0]["cin"]

    # NCHW -> (H, N_pad, W*Cin): batch on sublanes, channels fastest on lanes.
    n_pad = ((n + b_tile - 1) // b_tile) * b_tile
    x = jnp.transpose(x_nchw, (2, 0, 3, 1)).reshape(h, n, w * cin)
    if n_pad != n:
        x = jnp.pad(x, ((0, 0), (0, n_pad - n), (0, 0)))
    x = x.astype(jnp.bfloat16)
    nb = n_pad // b_tile

    in_specs = [pl.BlockSpec((h, b_tile, w * cin), lambda i: (0, i, 0))]
    inputs = [x]
    for q, b in packs:                                 # constant index maps:
        in_specs += [pl.BlockSpec(q.shape, lambda i: (0, 0)),
                     pl.BlockSpec(b.shape, lambda i: (0, 0))]
        inputs += [q, b]

    cap = [d for d in dims if d["name"] != "stem"]     # layer1..layer4 captures
    out_shapes = tuple(
        jax.ShapeDtypeStruct((nb, d["h_out"] * b_tile, d["w_out"] * d["cout"]),
                             jnp.bfloat16) for d in cap)
    out_specs = tuple(
        pl.BlockSpec((1, d["h_out"] * b_tile, d["w_out"] * d["cout"]),
                     lambda i: (i, 0, 0)) for d in cap)

    outs = pl.pallas_call(
        _make_kernel(dims, b_tile),
        out_shape=out_shapes,
        grid_spec=pltpu.PrefetchScalarGridSpec(
            num_scalar_prefetch=0,
            grid=(nb,),                                # blocked batch axis only
            in_specs=in_specs,
            out_specs=out_specs,
        ),
        compiler_params=pltpu.CompilerParams(
            dimension_semantics=("parallel",),
        ),
    )(*inputs)

    features = {}
    for k, (d, y) in enumerate(zip(cap, outs)):
        ho, wo, co = d["h_out"], d["w_out"], d["cout"]
        y = y.reshape(nb, ho, b_tile, wo, co)
        y0 = y[0, :, 0]                                # first image (like [0].detach())
        features[k] = jnp.transpose(y0, (2, 0, 1)).astype(jnp.float32)  # CHW
    # TODO(synk): attention-pool / projection head of encode_image omitted —
    # its output `f` is discarded by FeatureExtractor.forward().
    return features


# ----------------------------------------------------------------------------
# Pure-JAX f32 reference (for correctness check)
# ----------------------------------------------------------------------------
def _conv3x3_relu_ref(x_nhwc, weight, bias, stride):
    w_hwio = jnp.transpose(weight, (2, 3, 1, 0))
    y = jax.lax.conv_general_dilated(
        x_nhwc, w_hwio, window_strides=(stride, stride),
        padding=((_PAD, _PAD), (_PAD, _PAD)),
        dimension_numbers=("NHWC", "HWIO", "NHWC"))
    return jnp.maximum(y + bias, 0.0)


def feature_extractor_reference(params, x_nchw):
    x = jnp.transpose(x_nchw, (0, 2, 3, 1))
    feats, k = {}, 0
    for name, _, _, stride in _LAYER_CFG:
        x = _conv3x3_relu_ref(x, params[name]["w"], params[name]["b"], stride)
        if name != "stem":
            feats[k] = jnp.transpose(x[0], (2, 0, 1))
            k += 1
    return feats


if __name__ == "__main__":
    key = jax.random.PRNGKey(0)
    kx, kp = jax.random.split(key)
    x = jax.random.normal(kx, (2, 3, 16, 16), jnp.float32)   # NCHW, like PyTorch
    params = init_params(kp)

    packs = pack_backbone(params, 16, 16)                    # one-time init repack

    fwd = jax.jit(feature_extractor_forward)
    feats = fwd(packs, x)
    feats = jax.tree_util.tree_map(jax.block_until_ready, feats)

    # Shape checks: same captures as the PyTorch forward hooks.
    assert set(feats.keys()) == {0, 1, 2, 3}
    assert feats[0].shape == (8, 16, 16)
    assert feats[1].shape == (16, 8, 8)
    assert feats[2].shape == (32, 4, 4)
    assert feats[3].shape == (64, 2, 2)

    # Numerical check vs. f32 reference (kernel uses bf16 operands, f32 accum).
    ref = feature_extractor_reference(params, x)
    for k in range(4):
        err = float(jnp.max(jnp.abs(feats[k] - ref[k])))
        assert jnp.allclose(feats[k], ref[k], atol=1e-1, rtol=1e-1), (k, err)

    print("KERNEL_OK")
</pallas_src>

<mosaic_0001>
module attributes {stable_mosaic.version = 11 : i64} {
  func.func @kernel(%arg0: i32, %arg1: memref<16x8x48xbf16, #tpu.memory_space<vmem>>, %arg2: memref<144x128xbf16, #tpu.memory_space<vmem>>, %arg3: memref<1x128xf32, #tpu.memory_space<vmem>>, %arg4: memref<384x128xbf16, #tpu.memory_space<vmem>>, %arg5: memref<1x128xf32, #tpu.memory_space<vmem>>, %arg6: memref<384x128xbf16, #tpu.memory_space<vmem>>, %arg7: memref<1x128xf32, #tpu.memory_space<vmem>>, %arg8: memref<384x128xbf16, #tpu.memory_space<vmem>>, %arg9: memref<1x128xf32, #tpu.memory_space<vmem>>, %arg10: memref<384x128xbf16, #tpu.memory_space<vmem>>, %arg11: memref<1x128xf32, #tpu.memory_space<vmem>>, %arg12: memref<1x128x128xbf16, #tpu.memory_space<vmem>>, %arg13: memref<1x64x128xbf16, #tpu.memory_space<vmem>>, %arg14: memref<1x32x128xbf16, #tpu.memory_space<vmem>>, %arg15: memref<1x16x128xbf16, #tpu.memory_space<vmem>>) attributes {dimension_semantics = [#tpu.dimension_semantics<parallel>], iteration_bounds = array<i64: 1>, scalar_prefetch = 0 : i64, scratch_operands = 0 : i64, tpu.core_type = #tpu.core_type<tc>, window_params = [{transform_indices = @transform_0, window_bounds = array<i64: 16, 8, 48>}, {pipeline_mode = #tpu.pipeline_mode<synchronous>, transform_indices = @transform_1, window_bounds = array<i64: 144, 128>}, {pipeline_mode = #tpu.pipeline_mode<synchronous>, transform_indices = @transform_2, window_bounds = array<i64: 1, 128>}, {pipeline_mode = #tpu.pipeline_mode<synchronous>, transform_indices = @transform_3, window_bounds = array<i64: 384, 128>}, {pipeline_mode = #tpu.pipeline_mode<synchronous>, transform_indices = @transform_4, window_bounds = array<i64: 1, 128>}, {pipeline_mode = #tpu.pipeline_mode<synchronous>, transform_indices = @transform_5, window_bounds = array<i64: 384, 128>}, {pipeline_mode = #tpu.pipeline_mode<synchronous>, transform_indices = @transform_6, window_bounds = array<i64: 1, 128>}, {pipeline_mode = #tpu.pipeline_mode<synchronous>, transform_indices = @transform_7, window_bounds = array<i64: 384, 128>}, {pipeline_mode = #tpu.pipeline_mode<synchronous>, transform_indices = @transform_8, window_bounds = array<i64: 1, 128>}, {pipeline_mode = #tpu.pipeline_mode<synchronous>, transform_indices = @transform_9, window_bounds = array<i64: 384, 128>}, {pipeline_mode = #tpu.pipeline_mode<synchronous>, transform_indices = @transform_10, window_bounds = array<i64: 1, 128>}, {transform_indices = @transform_11, window_bounds = array<i64: 1, 128, 128>}, {transform_indices = @transform_12, window_bounds = array<i64: 1, 64, 128>}, {transform_indices = @transform_13, window_bounds = array<i64: 1, 32, 128>}, {transform_indices = @transform_14, window_bounds = array<i64: 1, 16, 128>}]} {
    %c0 = arith.constant 0 : index
    %c0_0 = arith.constant 0 : index
    %c0_1 = arith.constant 0 : index
    %0 = vector.load %arg1[%c0, %c0_0, %c0_1] : memref<16x8x48xbf16, #tpu.memory_space<vmem>>, vector<16x8x48xbf16>
    %cst = arith.constant 0.000000e+00 : bf16
    %1 = vector.broadcast %cst : bf16 to vector<1x8x48xbf16>
    %cst_2 = arith.constant 0.000000e+00 : bf16
    %2 = vector.broadcast %cst_2 : bf16 to vector<1x8x48xbf16>
    %3 = tpu.concatenate %1, %0, %2 in 0 : vector<1x8x48xbf16>, vector<16x8x48xbf16>, vector<1x8x48xbf16> -> vector<18x8x48xbf16>
    %4 = vector.extract_strided_slice %3 {offsets = [0, 0, 0], sizes = [16, 8, 48], strides = [1, 1, 1]} : vector<18x8x48xbf16> to vector<16x8x48xbf16>
    %5 = vector.extract_strided_slice %3 {offsets = [1, 0, 0], sizes = [16, 8, 48], strides = [1, 1, 1]} : vector<18x8x48xbf16> to vector<16x8x48xbf16>
    %6 = vector.extract_strided_slice %3 {offsets = [2, 0, 0], sizes = [16, 8, 48], strides = [1, 1, 1]} : vector<18x8x48xbf16> to vector<16x8x48xbf16>
    %7 = tpu.concatenate %4, %5, %6 in 2 : vector<16x8x48xbf16>, vector<16x8x48xbf16>, vector<16x8x48xbf16> -> vector<16x8x144xbf16>
    %8 = vector.shape_cast %7 : vector<16x8x144xbf16> to vector<128x144xbf16>
    %c0_3 = arith.constant 0 : index
    %c0_4 = arith.constant 0 : index
    %9 = vector.load %arg2[%c0_3, %c0_4] : memref<144x128xbf16, #tpu.memory_space<vmem>>, vector<144x128xbf16>
    %cst_5 = arith.constant dense<0.000000e+00> : vector<128x128xf32>
    %10 = tpu.matmul %8, %9, %cst_5 {dimension_numbers = #tpu.dot_dimension_numbers<[1], [0], [0], [1], [0, 0, 1, 1], [], []>} : vector<128x144xbf16>, vector<144x128xbf16>, vector<128x128xf32> -> vector<128x128xf32>
    %c0_6 = arith.constant 0 : index
    %c0_7 = arith.constant 0 : index
    %11 = vector.load %arg3[%c0_6, %c0_7] : memref<1x128xf32, #tpu.memory_space<vmem>>, vector<1x128xf32>
    %12 = vector.broadcast %11 : vector<1x128xf32> to vector<128x128xf32>
    %13 = arith.addf %10, %12 : vector<128x128xf32>
    %cst_8 = arith.constant 0.000000e+00 : f32
    %14 = vector.broadcast %cst_8 : f32 to vector<128x128xf32>
    %15 = arith.maximumf %13, %14 : vector<128x128xf32>
    %16 = arith.truncf %15 : vector<128x128xf32> to vector<128x128xbf16>
    %17 = vector.shape_cast %16 : vector<128x128xbf16> to vector<16x8x128xbf16>
    %cst_9 = arith.constant 0.000000e+00 : bf16
    %18 = vector.broadcast %cst_9 : bf16 to vector<1x8x128xbf16>
    %cst_10 = arith.constant 0.000000e+00 : bf16
    %19 = vector.broadcast %cst_10 : bf16 to vector<1x8x128xbf16>
    %20 = tpu.concatenate %18, %17, %19 in 0 : vector<1x8x128xbf16>, vector<16x8x128xbf16>, vector<1x8x128xbf16> -> vector<18x8x128xbf16>
    %21 = vector.extract_strided_slice %20 {offsets = [0, 0, 0], sizes = [16, 8, 128], strides = [1, 1, 1]} : vector<18x8x128xbf16> to vector<16x8x128xbf16>
    %22 = vector.extract_strided_slice %20 {offsets = [1, 0, 0], sizes = [16, 8, 128], strides = [1, 1, 1]} : vector<18x8x128xbf16> to vector<16x8x128xbf16>
    %23 = vector.extract_strided_slice %20 {offsets = [2, 0, 0], sizes = [16, 8, 128], strides = [1, 1, 1]} : vector<18x8x128xbf16> to vector<16x8x128xbf16>
    %24 = tpu.concatenate %21, %22, %23 in 2 : vector<16x8x128xbf16>, vector<16x8x128xbf16>, vector<16x8x128xbf16> -> vector<16x8x384xbf16>
    %25 = vector.shape_cast %24 : vector<16x8x384xbf16> to vector<128x384xbf16>
    %c0_11 = arith.constant 0 : index
    %c0_12 = arith.constant 0 : index
    %26 = vector.load %arg4[%c0_11, %c0_12] : memref<384x128xbf16, #tpu.memory_space<vmem>>, vector<384x128xbf16>
    %cst_13 = arith.constant dense<0.000000e+00> : vector<128x128xf32>
    %27 = tpu.matmul %25, %26, %cst_13 {dimension_numbers = #tpu.dot_dimension_numbers<[1], [0], [0], [1], [0, 0, 1, 1], [], []>} : vector<128x384xbf16>, vector<384x128xbf16>, vector<128x128xf32> -> vector<128x128xf32>
    %c0_14 = arith.constant 0 : index
    %c0_15 = arith.constant 0 : index
    %28 = vector.load %arg5[%c0_14, %c0_15] : memref<1x128xf32, #tpu.memory_space<vmem>>, vector<1x128xf32>
    %29 = vector.broadcast %28 : vector<1x128xf32> to vector<128x128xf32>
    %30 = arith.addf %27, %29 : vector<128x128xf32>
    %cst_16 = arith.constant 0.000000e+00 : f32
    %31 = vector.broadcast %cst_16 : f32 to vector<128x128xf32>
    %32 = arith.maximumf %30, %31 : vector<128x128xf32>
    %33 = arith.truncf %32 : vector<128x128xf32> to vector<128x128xbf16>
    %c0_17 = arith.constant 0 : index
    %c0_18 = arith.constant 0 : index
    %c0_19 = arith.constant 0 : index
    %34 = vector.load %arg12[%c0_17, %c0_18, %c0_19] : memref<1x128x128xbf16, #tpu.memory_space<vmem>>, vector<1x128x128xbf16>
    %35 = vector.shape_cast %34 : vector<1x128x128xbf16> to vector<128x128xbf16>
    %36 = vector.shape_cast %33 : vector<128x128xbf16> to vector<1x128x128xbf16>
    tpu.vector_store %arg12[%c0_17, %c0_18, %c0_19], %36 {strides = array<i32>} : memref<1x128x128xbf16, #tpu.memory_space<vmem>>, vector<1x128x128xbf16>,
    %37 = vector.shape_cast %33 : vector<128x128xbf16> to vector<16x8x128xbf16>
    %cst_20 = arith.constant 0.000000e+00 : bf16
    %38 = vector.broadcast %cst_20 : bf16 to vector<1x8x128xbf16>
    %cst_21 = arith.constant 0.000000e+00 : bf16
    %39 = vector.broadcast %cst_21 : bf16 to vector<1x8x128xbf16>
    %40 = tpu.concatenate %38, %37, %39 in 0 : vector<1x8x128xbf16>, vector<16x8x128xbf16>, vector<1x8x128xbf16> -> vector<18x8x128xbf16>
    %41 = vector.extract_strided_slice %40 {offsets = [0, 0, 0], sizes = [16, 8, 128], strides = [1, 1, 1]} : vector<18x8x128xbf16> to vector<16x8x128xbf16>
    %42 = vector.shape_cast %41 : vector<16x8x128xbf16> to vector<8x2x8x128xbf16>
    %43 = vector.extract_strided_slice %42 {offsets = [0, 0, 0, 0], sizes = [8, 1, 8, 128], strides = [1, 1, 1, 1]} : vector<8x2x8x128xbf16> to vector<8x1x8x128xbf16>
    %44 = vector.shape_cast %43 : vector<8x1x8x128xbf16> to vector<8x8x128xbf16>
    %45 = vector.extract_strided_slice %40 {offsets = [1, 0, 0], sizes = [16, 8, 128], strides = [1, 1, 1]} : vector<18x8x128xbf16> to vector<16x8x128xbf16>
    %46 = vector.shape_cast %45 : vector<16x8x128xbf16> to vector<8x2x8x128xbf16>
    %47 = vector.extract_strided_slice %46 {offsets = [0, 0, 0, 0], sizes = [8, 1, 8, 128], strides = [1, 1, 1, 1]} : vector<8x2x8x128xbf16> to vector<8x1x8x128xbf16>
    %48 = vector.shape_cast %47 : vector<8x1x8x128xbf16> to vector<8x8x128xbf16>
    %49 = vector.extract_strided_slice %40 {offsets = [2, 0, 0], sizes = [16, 8, 128], strides = [1, 1, 1]} : vector<18x8x128xbf16> to vector<16x8x128xbf16>
    %50 = vector.shape_cast %49 : vector<16x8x128xbf16> to vector<8x2x8x128xbf16>
    %51 = vector.extract_strided_slice %50 {offsets = [0, 0, 0, 0], sizes = [8, 1, 8, 128], strides = [1, 1, 1, 1]} : vector<8x2x8x128xbf16> to vector<8x1x8x128xbf16>
    %52 = vector.shape_cast %51 : vector<8x1x8x128xbf16> to vector<8x8x128xbf16>
    %53 = tpu.concatenate %44, %48, %52 in 2 : vector<8x8x128xbf16>, vector<8x8x128xbf16>, vector<8x8x128xbf16> -> vector<8x8x384xbf16>
    %54 = vector.shape_cast %53 : vector<8x8x384xbf16> to vector<64x384xbf16>
    %c0_22 = arith.constant 0 : index
    %c0_23 = arith.constant 0 : index
    %55 = vector.load %arg6[%c0_22, %c0_23] : memref<384x128xbf16, #tpu.memory_space<vmem>>, vector<384x128xbf16>
    %cst_24 = arith.constant dense<0.000000e+00> : vector<64x128xf32>
    %56 = tpu.matmul %54, %55, %cst_24 {dimension_numbers = #tpu.dot_dimension_numbers<[1], [0], [0], [1], [0, 0, 1, 1], [], []>} : vector<64x384xbf16>, vector<384x128xbf16>, vector<64x128xf32> -> vector<64x128xf32>
    %c0_25 = arith.constant 0 : index
    %c0_26 = arith.constant 0 : index
    %57 = vector.load %arg7[%c0_25, %c0_26] : memref<1x128xf32, #tpu.memory_space<vmem>>, vector<1x128xf32>
    %58 = vector.broadcast %57 : vector<1x128xf32> to vector<64x128xf32>
    %59 = arith.addf %56, %58 : vector<64x128xf32>
    %cst_27 = arith.constant 0.000000e+00 : f32
    %60 = vector.broadcast %cst_27 : f32 to vector<64x128xf32>
    %61 = arith.maximumf %59, %60 : vector<64x128xf32>
    %62 = arith.truncf %61 : vector<64x128xf32> to vector<64x128xbf16>
    %c0_28 = arith.constant 0 : index
    %c0_29 = arith.constant 0 : index
    %c0_30 = arith.constant 0 : index
    %63 = vector.load %arg13[%c0_28, %c0_29, %c0_30] : memref<1x64x128xbf16, #tpu.memory_space<vmem>>, vector<1x64x128xbf16>
    %64 = vector.shape_cast %63 : vector<1x64x128xbf16> to vector<64x128xbf16>
    %65 = vector.shape_cast %62 : vector<64x128xbf16> to vector<1x64x128xbf16>
    tpu.vector_store %arg13[%c0_28, %c0_29, %c0_30], %65 {strides = array<i32>} : memref<1x64x128xbf16, #tpu.memory_space<vmem>>, vector<1x64x128xbf16>,
    %66 = vector.shape_cast %62 : vector<64x128xbf16> to vector<8x8x128xbf16>
    %cst_31 = arith.constant 0.000000e+00 : bf16
    %67 = vector.broadcast %cst_31 : bf16 to vector<1x8x128xbf16>
    %cst_32 = arith.constant 0.000000e+00 : bf16
    %68 = vector.broadcast %cst_32 : bf16 to vector<1x8x128xbf16>
    %69 = tpu.concatenate %67, %66, %68 in 0 : vector<1x8x128xbf16>, vector<8x8x128xbf16>, vector<1x8x128xbf16> -> vector<10x8x128xbf16>
    %70 = vector.extract_strided_slice %69 {offsets = [0, 0, 0], sizes = [8, 8, 128], strides = [1, 1, 1]} : vector<10x8x128xbf16> to vector<8x8x128xbf16>
    %71 = vector.shape_cast %70 : vector<8x8x128xbf16> to vector<4x2x8x128xbf16>
    %72 = vector.extract_strided_slice %71 {offsets = [0, 0, 0, 0], sizes = [4, 1, 8, 128], strides = [1, 1, 1, 1]} : vector<4x2x8x128xbf16> to vector<4x1x8x128xbf16>
    %73 = vector.shape_cast %72 : vector<4x1x8x128xbf16> to vector<4x8x128xbf16>
    %74 = vector.extract_strided_slice %69 {offsets = [1, 0, 0], sizes = [8, 8, 128], strides = [1, 1, 1]} : vector<10x8x128xbf16> to vector<8x8x128xbf16>
    %75 = vector.shape_cast %74 : vector<8x8x128xbf16> to vector<4x2x8x128xbf16>
    %76 = vector.extract_strided_slice %75 {offsets = [0, 0, 0, 0], sizes = [4, 1, 8, 128], strides = [1, 1, 1, 1]} : vector<4x2x8x128xbf16> to vector<4x1x8x128xbf16>
    %77 = vector.shape_cast %76 : vector<4x1x8x128xbf16> to vector<4x8x128xbf16>
    %78 = vector.extract_strided_slice %69 {offsets = [2, 0, 0], sizes = [8, 8, 128], strides = [1, 1, 1]} : vector<10x8x128xbf16> to vector<8x8x128xbf16>
    %79 = vector.shape_cast %78 : vector<8x8x128xbf16> to vector<4x2x8x128xbf16>
    %80 = vector.extract_strided_slice %79 {offsets = [0, 0, 0, 0], sizes = [4, 1, 8, 128], strides = [1, 1, 1, 1]} : vector<4x2x8x128xbf16> to vector<4x1x8x128xbf16>
    %81 = vector.shape_cast %80 : vector<4x1x8x128xbf16> to vector<4x8x128xbf16>
    %82 = tpu.concatenate %73, %77, %81 in 2 : vector<4x8x128xbf16>, vector<4x8x128xbf16>, vector<4x8x128xbf16> -> vector<4x8x384xbf16>
    %83 = vector.shape_cast %82 : vector<4x8x384xbf16> to vector<32x384xbf16>
    %c0_33 = arith.constant 0 : index
    %c0_34 = arith.constant 0 : index
    %84 = vector.load %arg8[%c0_33, %c0_34] : memref<384x128xbf16, #tpu.memory_space<vmem>>, vector<384x128xbf16>
    %cst_35 = arith.constant dense<0.000000e+00> : vector<32x128xf32>
    %85 = tpu.matmul %83, %84, %cst_35 {dimension_numbers = #tpu.dot_dimension_numbers<[1], [0], [0], [1], [0, 0, 1, 1], [], []>} : vector<32x384xbf16>, vector<384x128xbf16>, vector<32x128xf32> -> vector<32x128xf32>
    %c0_36 = arith.constant 0 : index
    %c0_37 = arith.constant 0 : index
    %86 = vector.load %arg9[%c0_36, %c0_37] : memref<1x128xf32, #tpu.memory_space<vmem>>, vector<1x128xf32>
    %87 = vector.broadcast %86 : vector<1x128xf32> to vector<32x128xf32>
    %88 = arith.addf %85, %87 : vector<32x128xf32>
    %cst_38 = arith.constant 0.000000e+00 : f32
    %89 = vector.broadcast %cst_38 : f32 to vector<32x128xf32>
    %90 = arith.maximumf %88, %89 : vector<32x128xf32>
    %91 = arith.truncf %90 : vector<32x128xf32> to vector<32x128xbf16>
    %c0_39 = arith.constant 0 : index
    %c0_40 = arith.constant 0 : index
    %c0_41 = arith.constant 0 : index
    %92 = vector.load %arg14[%c0_39, %c0_40, %c0_41] : memref<1x32x128xbf16, #tpu.memory_space<vmem>>, vector<1x32x128xbf16>
    %93 = vector.shape_cast %92 : vector<1x32x128xbf16> to vector<32x128xbf16>
    %94 = vector.shape_cast %91 : vector<32x128xbf16> to vector<1x32x128xbf16>
    tpu.vector_store %arg14[%c0_39, %c0_40, %c0_41], %94 {strides = array<i32>} : memref<1x32x128xbf16, #tpu.memory_space<vmem>>, vector<1x32x128xbf16>,
    %95 = vector.shape_cast %91 : vector<32x128xbf16> to vector<4x8x128xbf16>
    %cst_42 = arith.constant 0.000000e+00 : bf16
    %96 = vector.broadcast %cst_42 : bf16 to vector<1x8x128xbf16>
    %cst_43 = arith.constant 0.000000e+00 : bf16
    %97 = vector.broadcast %cst_43 : bf16 to vector<1x8x128xbf16>
    %98 = tpu.concatenate %96, %95, %97 in 0 : vector<1x8x128xbf16>, vector<4x8x128xbf16>, vector<1x8x128xbf16> -> vector<6x8x128xbf16>
    %99 = vector.extract_strided_slice %98 {offsets = [0, 0, 0], sizes = [4, 8, 128], strides = [1, 1, 1]} : vector<6x8x128xbf16> to vector<4x8x128xbf16>
    %100 = vector.shape_cast %99 : vector<4x8x128xbf16> to vector<2x2x8x128xbf16>
    %101 = vector.extract_strided_slice %100 {offsets = [0, 0, 0, 0], sizes = [2, 1, 8, 128], strides = [1, 1, 1, 1]} : vector<2x2x8x128xbf16> to vector<2x1x8x128xbf16>
    %102 = vector.shape_cast %101 : vector<2x1x8x128xbf16> to vector<2x8x128xbf16>
    %103 = vector.extract_strided_slice %98 {offsets = [1, 0, 0], sizes = [4, 8, 128], strides = [1, 1, 1]} : vector<6x8x128xbf16> to vector<4x8x128xbf16>
    %104 = vector.shape_cast %103 : vector<4x8x128xbf16> to vector<2x2x8x128xbf16>
    %105 = vector.extract_strided_slice %104 {offsets = [0, 0, 0, 0], sizes = [2, 1, 8, 128], strides = [1, 1, 1, 1]} : vector<2x2x8x128xbf16> to vector<2x1x8x128xbf16>
    %106 = vector.shape_cast %105 : vector<2x1x8x128xbf16> to vector<2x8x128xbf16>
    %107 = vector.extract_strided_slice %98 {offsets = [2, 0, 0], sizes = [4, 8, 128], strides = [1, 1, 1]} : vector<6x8x128xbf16> to vector<4x8x128xbf16>
    %108 = vector.shape_cast %107 : vector<4x8x128xbf16> to vector<2x2x8x128xbf16>
    %109 = vector.extract_strided_slice %108 {offsets = [0, 0, 0, 0], sizes = [2, 1, 8, 128], strides = [1, 1, 1, 1]} : vector<2x2x8x128xbf16> to vector<2x1x8x128xbf16>
    %110 = vector.shape_cast %109 : vector<2x1x8x128xbf16> to vector<2x8x128xbf16>
    %111 = tpu.concatenate %102, %106, %110 in 2 : vector<2x8x128xbf16>, vector<2x8x128xbf16>, vector<2x8x128xbf16> -> vector<2x8x384xbf16>
    %112 = vector.shape_cast %111 : vector<2x8x384xbf16> to vector<16x384xbf16>
    %c0_44 = arith.constant 0 : index
    %c0_45 = arith.constant 0 : index
    %113 = vector.load %arg10[%c0_44, %c0_45] : memref<384x128xbf16, #tpu.memory_space<vmem>>, vector<384x128xbf16>
    %cst_46 = arith.constant dense<0.000000e+00> : vector<16x128xf32>
    %114 = tpu.matmul %112, %113, %cst_46 {dimension_numbers = #tpu.dot_dimension_numbers<[1], [0], [0], [1], [0, 0, 1, 1], [], []>} : vector<16x384xbf16>, vector<384x128xbf16>, vector<16x128xf32> -> vector<16x128xf32>
    %c0_47 = arith.constant 0 : index
    %c0_48 = arith.constant 0 : index
    %115 = vector.load %arg11[%c0_47, %c0_48] : memref<1x128xf32, #tpu.memory_space<vmem>>, vector<1x128xf32>
    %116 = vector.broadcast %115 : vector<1x128xf32> to vector<16x128xf32>
    %117 = arith.addf %114, %116 : vector<16x128xf32>
    %cst_49 = arith.constant 0.000000e+00 : f32
    %118 = vector.broadcast %cst_49 : f32 to vector<16x128xf32>
    %119 = arith.maximumf %117, %118 : vector<16x128xf32>
    %120 = arith.truncf %119 : vector<16x128xf32> to vector<16x128xbf16>
    %c0_50 = arith.constant 0 : index
    %c0_51 = arith.constant 0 : index
    %c0_52 = arith.constant 0 : index
    %121 = vector.load %arg15[%c0_50, %c0_51, %c0_52] : memref<1x16x128xbf16, #tpu.memory_space<vmem>>, vector<1x16x128xbf16>
    %122 = vector.shape_cast %121 : vector<1x16x128xbf16> to vector<16x128xbf16>
    %123 = vector.shape_cast %120 : vector<16x128xbf16> to vector<1x16x128xbf16>
    tpu.vector_store %arg15[%c0_50, %c0_51, %c0_52], %123 {strides = array<i32>} : memref<1x16x128xbf16, #tpu.memory_space<vmem>>, vector<1x16x128xbf16>,
    return
  }
  func.func @transform_0(%arg0: i32) -> (i32, i32, i32) {
    %c0_i32 = arith.constant 0 : i32
    %c0_i32_0 = arith.constant 0 : i32
    %c0_i32_1 = arith.constant 0 : i32
    return %c0_i32, %arg0, %c0_i32_0 : i32, i32, i32
  }
  func.func @transform_1(%arg0: i32) -> (i32, i32) {
    %c0_i32 = arith.constant 0 : i32
    %c0_i32_0 = arith.constant 0 : i32
    %c0_i32_1 = arith.constant 0 : i32
    return %c0_i32, %c0_i32_0 : i32, i32
  }
  func.func @transform_2(%arg0: i32) -> (i32, i32) {
    %c0_i32 = arith.constant 0 : i32
    %c0_i32_0 = arith.constant 0 : i32
    %c0_i32_1 = arith.constant 0 : i32
    return %c0_i32, %c0_i32_0 : i32, i32
  }
  func.func @transform_3(%arg0: i32) -> (i32, i32) {
    %c0_i32 = arith.constant 0 : i32
    %c0_i32_0 = arith.constant 0 : i32
    %c0_i32_1 = arith.constant 0 : i32
    return %c0_i32, %c0_i32_0 : i32, i32
  }
  func.func @transform_4(%arg0: i32) -> (i32, i32) {
    %c0_i32 = arith.constant 0 : i32
    %c0_i32_0 = arith.constant 0 : i32
    %c0_i32_1 = arith.constant 0 : i32
    return %c0_i32, %c0_i32_0 : i32, i32
  }
  func.func @transform_5(%arg0: i32) -> (i32, i32) {
    %c0_i32 = arith.constant 0 : i32
    %c0_i32_0 = arith.constant 0 : i32
    %c0_i32_1 = arith.constant 0 : i32
    return %c0_i32, %c0_i32_0 : i32, i32
  }
  func.func @transform_6(%arg0: i32) -> (i32, i32) {
    %c0_i32 = arith.constant 0 : i32
    %c0_i32_0 = arith.constant 0 : i32
    %c0_i32_1 = arith.constant 0 : i32
    return %c0_i32, %c0_i32_0 : i32, i32
  }
  func.func @transform_7(%arg0: i32) -> (i32, i32) {
    %c0_i32 = arith.constant 0 : i32
    %c0_i32_0 = arith.constant 0 : i32
    %c0_i32_1 = arith.constant 0 : i32
    return %c0_i32, %c0_i32_0 : i32, i32
  }
  func.func @transform_8(%arg0: i32) -> (i32, i32) {
    %c0_i32 = arith.constant 0 : i32
    %c0_i32_0 = arith.constant 0 : i32
    %c0_i32_1 = arith.constant 0 : i32
    return %c0_i32, %c0_i32_0 : i32, i32
  }
  func.func @transform_9(%arg0: i32) -> (i32, i32) {
    %c0_i32 = arith.constant 0 : i32
    %c0_i32_0 = arith.constant 0 : i32
    %c0_i32_1 = arith.constant 0 : i32
    return %c0_i32, %c0_i32_0 : i32, i32
  }
  func.func @transform_10(%arg0: i32) -> (i32, i32) {
    %c0_i32 = arith.constant 0 : i32
    %c0_i32_0 = arith.constant 0 : i32
    %c0_i32_1 = arith.constant 0 : i32
    return %c0_i32, %c0_i32_0 : i32, i32
  }
  func.func @transform_11(%arg0: i32) -> (i32, i32, i32) {
    %c0_i32 = arith.constant 0 : i32
    %c0_i32_0 = arith.constant 0 : i32
    %c0_i32_1 = arith.constant 0 : i32
    return %arg0, %c0_i32, %c0_i32_0 : i32, i32, i32
  }
  func.func @transform_12(%arg0: i32) -> (i32, i32, i32) {
    %c0_i32 = arith.constant 0 : i32
    %c0_i32_0 = arith.constant 0 : i32
    %c0_i32_1 = arith.constant 0 : i32
    return %arg0, %c0_i32, %c0_i32_0 : i32, i32, i32
  }
  func.func @transform_13(%arg0: i32) -> (i32, i32, i32) {
    %c0_i32 = arith.constant 0 : i32
    %c0_i32_0 = arith.constant 0 : i32
    %c0_i32_1 = arith.constant 0 : i32
    return %arg0, %c0_i32, %c0_i32_0 : i32, i32, i32
  }
  func.func @transform_14(%arg0: i32) -> (i32, i32, i32) {
    %c0_i32 = arith.constant 0 : i32
    %c0_i32_0 = arith.constant 0 : i32
    %c0_i32_1 = arith.constant 0 : i32
    return %arg0, %c0_i32, %c0_i32_0 : i32, i32, i32
  }
}

</mosaic_0001>

<llo_original>
// kernel: feature_extractor_forward.1
$region0: #{feature_extractor_forward.1}
  #allocation0 [shape = 'u32[]', space=smem, size = 0x4, offset = 0x4, fixed_abs, tag = 'smem constant byte address 0x4 - core index']
  #allocation1 [shape = 'u32[72,128]{1,0:T(1,128)}', space=vmem, size = 0x9000, scoped, tag = 'internal scratch']
  %s0 = inlined_call_operand.vmem [shape: bf16[16,8,48], index: 0, kind: input, shape index: {}]
  %s1 = inlined_call_operand.hbm [shape: bf16[144,128], index: 1, kind: input, shape index: {}]
  %s2 = inlined_call_operand.vmem [shape: f32[1,128], index: 2, kind: input, shape index: {}]
  %s3 = inlined_call_operand.vmem [shape: bf16[384,128], index: 3, kind: input, shape index: {}]
  %s4 = inlined_call_operand.vmem [shape: f32[1,128], index: 4, kind: input, shape index: {}]
  %s5 = inlined_call_operand.vmem [shape: bf16[384,128], index: 5, kind: input, shape index: {}]
  %s6 = inlined_call_operand.hbm [shape: f32[1,128], index: 6, kind: input, shape index: {}]
  %s7 = inlined_call_operand.hbm [shape: bf16[384,128], index: 7, kind: input, shape index: {}]
  %s8 = inlined_call_operand.hbm [shape: f32[1,128], index: 8, kind: input, shape index: {}]
  %s9 = inlined_call_operand.hbm [shape: bf16[384,128], index: 9, kind: input, shape index: {}]
  %s10 = inlined_call_operand.hbm [shape: f32[1,128], index: 10, kind: input, shape index: {}]
  %s11 = inlined_call_operand.vmem [shape: bf16[1,128,128], index: 11, kind: output, shape index: {0}]
  %s12 = inlined_call_operand.vmem [shape: bf16[1,64,128], index: 12, kind: output, shape index: {1}]
  %s13 = inlined_call_operand.vmem [shape: bf16[1,32,128], index: 13, kind: output, shape index: {2}]
  %s14 = inlined_call_operand.vmem [shape: bf16[1,16,128], index: 14, kind: output, shape index: {3}]
  %15 = xla_tuple %s11, %s12, %s13, %s14
  %s16 = sld [smem:[#allocation0]]
  $region102: #{feature_extractor_forward.1} parent=0
    _
  %s18 = ssub.s32 1, %s16
  %s19 = scalar_select 0, %s18, %s16
  $region1: #{feature_extractor_forward.1} parent=0
    #allocation2 [shape = 'u8[36864]{0}', space=vmem, size = 0x9000, scoped, tag = 'input window, operand 1, single buffered']
    #allocation3 [shape = 's32[1]{0}', space=sflag, size = 0x4, scoped, tag = 'scoped memory for feature_extractor_forward.1']
    #allocation4 [shape = 'u8[512]{0}', space=vmem, size = 0x400, scoped, tag = 'input window, operand 6, single buffered']
    #allocation5 [shape = 's32[1]{0}', space=sflag, size = 0x4, scoped, tag = 'scoped memory for feature_extractor_forward.1']
    #allocation6 [shape = 'u8[98304]{0}', space=vmem, size = 0x18000, scoped, tag = 'input window, operand 7, single buffered']
    #allocation7 [shape = 'u8[512]{0}', space=vmem, size = 0x400, scoped, tag = 'input window, operand 8, single buffered']
    #allocation8 [shape = 's32[1]{0}', space=sflag, size = 0x4, scoped, tag = 'scoped memory for feature_extractor_forward.1']
    #allocation9 [shape = 'u8[98304]{0}', space=vmem, size = 0x18000, scoped, tag = 'input window, operand 9, single buffered']
    #allocation10 [shape = 'u8[512]{0}', space=vmem, size = 0x400, scoped, tag = 'input window, operand 10, single buffered']
    #allocation11 [shape = 's32[1]{0}', space=sflag, size = 0x4, scoped, tag = 'scoped memory for feature_extractor_forward.1']
    %20 = vsyncpa [#allocation3], 0
    %21 = vsyncpa [#allocation5], 0
    %22 = vsyncpa [#allocation8], 0
    %23 = vsyncpa [#allocation11], 0
    // Predicated region
    $region2: #{feature_extractor_forward.1} parent=1 // pred_check
      _
    $region3: #{feature_extractor_forward.1} parent=1 // pred_check_branch
      %25 = sbr.rel (0) target = $region5
    $region4: #{feature_extractor_forward.1} parent=1 // pred_region
      _
    $region5: #{feature_extractor_forward.1} parent=1 // pred_fallthru
      _
    // Predicated region
    $region6: #{feature_extractor_forward.1} parent=1 // pred_check
      _
    $region7: #{feature_extractor_forward.1} parent=1 // pred_check_branch
      %27 = sbr.rel (0) target = $region9
    $region8: #{feature_extractor_forward.1} parent=1 // pred_region
      %29 = vsyncadd [#allocation3], 0
      %s30 = sshll.u32 %s1, 4
      %s31 = int_to_ptr.hbm [resolvable:$true] %s30
      %s32 = sshll.u32 [#allocation2], 4
      %s33 = int_to_ptr.vmem [resolvable:$true] %s32
      %38 = dma.hbm_to_vmem [thread:$0]  %s31, 1152, %s33, [#allocation3], 64, 64, 4
    $region9: #{feature_extractor_forward.1} parent=1 // pred_fallthru
      _
    // Predicated region
    $region10: #{feature_extractor_forward.1} parent=1 // pred_check
      _
    $region11: #{feature_extractor_forward.1} parent=1 // pred_check_branch
      %40 = sbr.rel (0) target = $region13
    $region12: #{feature_extractor_forward.1} parent=1 // pred_region
      _
    $region13: #{feature_extractor_forward.1} parent=1 // pred_fallthru
      _
    // Predicated region
    $region14: #{feature_extractor_forward.1} parent=1 // pred_check
      _
    $region15: #{feature_extractor_forward.1} parent=1 // pred_check_branch
      %42 = sbr.rel (0) target = $region17
    $region16: #{feature_extractor_forward.1} parent=1 // pred_region
      _
    $region17: #{feature_extractor_forward.1} parent=1 // pred_fallthru
      _
    // Predicated region
    $region18: #{feature_extractor_forward.1} parent=1 // pred_check
      _
    $region19: #{feature_extractor_forward.1} parent=1 // pred_check_branch
      %44 = sbr.rel (0) target = $region21
    $region20: #{feature_extractor_forward.1} parent=1 // pred_region
      _
    $region21: #{feature_extractor_forward.1} parent=1 // pred_fallthru
      _
    // Predicated region
    $region22: #{feature_extractor_forward.1} parent=1 // pred_check
      _
    $region23: #{feature_extractor_forward.1} parent=1 // pred_check_branch
      %46 = sbr.rel (0) target = $region25
    $region24: #{feature_extractor_forward.1} parent=1 // pred_region
      _
    $region25: #{feature_extractor_forward.1} parent=1 // pred_fallthru
      _
    // Predicated region
    $region26: #{feature_extractor_forward.1} parent=1 // pred_check
      _
    $region27: #{feature_extractor_forward.1} parent=1 // pred_check_branch
      %48 = sbr.rel (0) target = $region29
    $region28: #{feature_extractor_forward.1} parent=1 // pred_region
      %50 = vsyncadd [#allocation5], 0
      %s52 = sshll.u32 %s6, 4
      %s53 = int_to_ptr.hbm [resolvable:$true] %s52
      %s54 = sshll.u32 [#allocation4], 4
      %s55 = int_to_ptr.vmem [resolvable:$true] %s54
      %57 = dma.hbm_to_vmem [thread:$0]  %s53, 16, %s55, [#allocation5]
    $region29: #{feature_extractor_forward.1} parent=1 // pred_fallthru
      _
    // Predicated region
    $region30: #{feature_extractor_forward.1} parent=1 // pred_check
      _
    $region31: #{feature_extractor_forward.1} parent=1 // pred_check_branch
      %59 = sbr.rel (0) target = $region33
    $region32: #{feature_extractor_forward.1} parent=1 // pred_region
      %61 = vsyncadd [#allocation5], 0
      %s62 = sshll.u32 %s7, 4
      %s63 = int_to_ptr.hbm [resolvable:$true] %s62
      %s64 = sshll.u32 [#allocation6], 4
      %s65 = int_to_ptr.vmem [resolvable:$true] %s64
      %70 = dma.hbm_to_vmem [thread:$0]  %s63, 3072, %s65, [#allocation5], 64, 64, 4
    $region33: #{feature_extractor_forward.1} parent=1 // pred_fallthru
      _
    // Predicated region
    $region34: #{feature_extractor_forward.1} parent=1 // pred_check
      _
    $region35: #{feature_extractor_forward.1} parent=1 // pred_check_branch
      %72 = sbr.rel (0) target = $region37
    $region36: #{feature_extractor_forward.1} parent=1 // pred_region
      %74 = vsyncadd [#allocation8], 0
      %s76 = sshll.u32 %s8, 4
      %s77 = int_to_ptr.hbm [resolvable:$true] %s76
      %s78 = sshll.u32 [#allocation7], 4
      %s79 = int_to_ptr.vmem [resolvable:$true] %s78
      %81 = dma.hbm_to_vmem [thread:$0]  %s77, 16, %s79, [#allocation8]
    $region37: #{feature_extractor_forward.1} parent=1 // pred_fallthru
      _
    // Predicated region
    $region38: #{feature_extractor_forward.1} parent=1 // pred_check
      _
    $region39: #{feature_extractor_forward.1} parent=1 // pred_check_branch
      %83 = sbr.rel (0) target = $region41
    $region40: #{feature_extractor_forward.1} parent=1 // pred_region
      %85 = vsyncadd [#allocation8], 0
      %s86 = sshll.u32 %s9, 4
      %s87 = int_to_ptr.hbm [resolvable:$true] %s86
      %s88 = sshll.u32 [#allocation9], 4
      %s89 = int_to_ptr.vmem [resolvable:$true] %s88
      %94 = dma.hbm_to_vmem [thread:$0]  %s87, 3072, %s89, [#allocation8], 64, 64, 4
    $region41: #{feature_extractor_forward.1} parent=1 // pred_fallthru
      _
    // Predicated region
    $region42: #{feature_extractor_forward.1} parent=1 // pred_check
      _
    $region43: #{feature_extractor_forward.1} parent=1 // pred_check_branch
      %96 = sbr.rel (0) target = $region45
    $region44: #{feature_extractor_forward.1} parent=1 // pred_region
      %98 = vsyncadd [#allocation11], 0
      %s100 = sshll.u32 %s10, 4
      %s101 = int_to_ptr.hbm [resolvable:$true] %s100
      %s102 = sshll.u32 [#allocation10], 4
      %s103 = int_to_ptr.vmem [resolvable:$true] %s102
      %105 = dma.hbm_to_vmem [thread:$0]  %s101, 16, %s103, [#allocation11]
    $region45: #{feature_extractor_forward.1} parent=1 // pred_fallthru
      _
    // Predicated region
    $region46: #{feature_extractor_forward.1} parent=1 // pred_check
      _
    $region47: #{feature_extractor_forward.1} parent=1 // pred_check_branch
      %107 = sbr.rel (0) target = $region49
    $region48: #{feature_extractor_forward.1} parent=1 // pred_region
      %109 = dma.done [#allocation3], 1152
    $region49: #{feature_extractor_forward.1} parent=1 // pred_fallthru
      _
    // Predicated region
    $region50: #{feature_extractor_forward.1} parent=1 // pred_check
      _
    $region51: #{feature_extractor_forward.1} parent=1 // pred_check_branch
      %111 = sbr.rel (0) target = $region53
    $region52: #{feature_extractor_forward.1} parent=1 // pred_region
      %113 = dma.done [#allocation5], 16
    $region53: #{feature_extractor_forward.1} parent=1 // pred_fallthru
      _
    // Predicated region
    $region54: #{feature_extractor_forward.1} parent=1 // pred_check
      _
    $region55: #{feature_extractor_forward.1} parent=1 // pred_check_branch
      %115 = sbr.rel (0) target = $region57
    $region56: #{feature_extractor_forward.1} parent=1 // pred_region
      %117 = dma.done [#allocation5], 3072
    $region57: #{feature_extractor_forward.1} parent=1 // pred_fallthru
      _
    // Predicated region
    $region58: #{feature_extractor_forward.1} parent=1 // pred_check
      _
    $region59: #{feature_extractor_forward.1} parent=1 // pred_check_branch
      %119 = sbr.rel (0) target = $region61
    $region60: #{feature_extractor_forward.1} parent=1 // pred_region
      %121 = dma.done [#allocation8], 16
    $region61: #{feature_extractor_forward.1} parent=1 // pred_fallthru
      _
    // Predicated region
    $region62: #{feature_extractor_forward.1} parent=1 // pred_check
      _
    $region63: #{feature_extractor_forward.1} parent=1 // pred_check_branch
      %123 = sbr.rel (0) target = $region65
    $region64: #{feature_extractor_forward.1} parent=1 // pred_region
      %125 = dma.done [#allocation8], 3072
    $region65: #{feature_extractor_forward.1} parent=1 // pred_fallthru
      _
    // Predicated region
    $region66: #{feature_extractor_forward.1} parent=1 // pred_check
      _
    $region67: #{feature_extractor_forward.1} parent=1 // pred_check_branch
      %127 = sbr.rel (0) target = $region69
    $region68: #{feature_extractor_forward.1} parent=1 // pred_region
      %129 = dma.done [#allocation11], 16
    $region69: #{feature_extractor_forward.1} parent=1 // pred_fallthru
      _
    %v131 = vld [vmem:[%s0] sm:$0xf]
    %v132 = vld [vmem:[%s0 + $0x4] sm:$0xf]
    %v133 = vld [vmem:[%s0 + $0x8] sm:$0xf]
    %v134 = vld [vmem:[%s0 + $0xc] sm:$0xf]
    %v135 = vld [vmem:[%s0 + $0x10] sm:$0xf]
    %v136 = vld [vmem:[%s0 + $0x14] sm:$0xf]
    %v137 = vld [vmem:[%s0 + $0x18] sm:$0xf]
    %v138 = vld [vmem:[%s0 + $0x1c] sm:$0xf]
    %v139 = vld [vmem:[%s0 + $0x20] sm:$0xf]
    %v140 = vld [vmem:[%s0 + $0x24] sm:$0xf]
    %v141 = vld [vmem:[%s0 + $0x28] sm:$0xf]
    %v142 = vld [vmem:[%s0 + $0x2c] sm:$0xf]
    %v143 = vld [vmem:[%s0 + $0x30] sm:$0xf]
    %v144 = vld [vmem:[%s0 + $0x34] sm:$0xf]
    %v145 = vld [vmem:[%s0 + $0x38] sm:$0xf]
    %v146 = vld [vmem:[%s0 + $0x3c] sm:$0xf]
    %163 = vrot.lane.b32.xlu0 %v131, 48
    %v164 = vpop.permute.xlu0 %163
    %165 = vrot.lane.b32.xlu0 %v132, 48
    %v166 = vpop.permute.xlu0 %165
    %167 = vrot.lane.b32.xlu0 %v133, 48
    %v168 = vpop.permute.xlu0 %167
    %169 = vrot.lane.b32.xlu0 %v134, 48
    %v170 = vpop.permute.xlu0 %169
    %171 = vrot.lane.b32.xlu0 %v135, 48
    %v172 = vpop.permute.xlu0 %171
    %173 = vrot.lane.b32.xlu0 %v136, 48
    %v174 = vpop.permute.xlu0 %173
    %175 = vrot.lane.b32.xlu0 %v137, 48
    %v176 = vpop.permute.xlu0 %175
    %177 = vrot.lane.b32.xlu0 %v138, 48
    %v178 = vpop.permute.xlu0 %177
    %179 = vrot.lane.b32.xlu0 %v139, 48
    %v180 = vpop.permute.xlu0 %179
    %181 = vrot.lane.b32.xlu0 %v140, 48
    %v182 = vpop.permute.xlu0 %181
    %183 = vrot.lane.b32.xlu0 %v141, 48
    %v184 = vpop.permute.xlu0 %183
    %185 = vrot.lane.b32.xlu0 %v142, 48
    %v186 = vpop.permute.xlu0 %185
    %187 = vrot.lane.b32.xlu0 %v143, 48
    %v188 = vpop.permute.xlu0 %187
    %189 = vrot.lane.b32.xlu0 %v144, 48
    %v190 = vpop.permute.xlu0 %189
    %191 = vrot.lane.b32.xlu0 %v145, 48
    %v192 = vpop.permute.xlu0 %191
    %193 = vrot.lane.b32.xlu0 %v146, 48
    %v194 = vpop.permute.xlu0 %193
    %196 = vrot.lane.b32.xlu0 %v132, 96
    %v197 = vpop.permute.xlu0 %196
    %198 = vrot.lane.b32.xlu0 %v133, 96
    %v199 = vpop.permute.xlu0 %198
    %200 = vrot.lane.b32.xlu0 %v134, 96
    %v201 = vpop.permute.xlu0 %200
    %202 = vrot.lane.b32.xlu0 %v135, 96
    %v203 = vpop.permute.xlu0 %202
    %204 = vrot.lane.b32.xlu0 %v136, 96
    %v205 = vpop.permute.xlu0 %204
    %206 = vrot.lane.b32.xlu0 %v137, 96
    %v207 = vpop.permute.xlu0 %206
    %208 = vrot.lane.b32.xlu0 %v138, 96
    %v209 = vpop.permute.xlu0 %208
    %210 = vrot.lane.b32.xlu0 %v139, 96
    %v211 = vpop.permute.xlu0 %210
    %212 = vrot.lane.b32.xlu0 %v140, 96
    %v213 = vpop.permute.xlu0 %212
    %214 = vrot.lane.b32.xlu0 %v141, 96
    %v215 = vpop.permute.xlu0 %214
    %216 = vrot.lane.b32.xlu0 %v142, 96
    %v217 = vpop.permute.xlu0 %216
    %218 = vrot.lane.b32.xlu0 %v143, 96
    %v219 = vpop.permute.xlu0 %218
    %220 = vrot.lane.b32.xlu0 %v144, 96
    %v221 = vpop.permute.xlu0 %220
    %222 = vrot.lane.b32.xlu0 %v145, 96
    %v223 = vpop.permute.xlu0 %222
    %224 = vrot.lane.b32.xlu0 %v146, 96
    %v225 = vpop.permute.xlu0 %224
    %226 = vrot.lane.b32.xlu0 0, 96
    %v227 = vpop.permute.xlu0 %226
    %vm228 = vcmask 392192
    %v231 = vsel %vm228, 0, %v164
    %v234 = vsel %vm228, %v131, %v166
    %v237 = vsel %vm228, %v132, %v168
    %v240 = vsel %vm228, %v133, %v170
    %v243 = vsel %vm228, %v134, %v172
    %v246 = vsel %vm228, %v135, %v174
    %v249 = vsel %vm228, %v136, %v176
    %v252 = vsel %vm228, %v137, %v178
    %v255 = vsel %vm228, %v138, %v180
    %v258 = vsel %vm228, %v139, %v182
    %v261 = vsel %vm228, %v140, %v184
    %v264 = vsel %vm228, %v141, %v186
    %v267 = vsel %vm228, %v142, %v188
    %v270 = vsel %vm228, %v143, %v190
    %v273 = vsel %vm228, %v144, %v192
    %v276 = vsel %vm228, %v145, %v194
    %vm277 = vcmask 785408
    %v279 = vsel %vm277, %v231, %v197
    %v281 = vsel %vm277, %v234, %v199
    %v283 = vsel %vm277, %v237, %v201
    %v285 = vsel %vm277, %v240, %v203
    %v287 = vsel %vm277, %v243, %v205
    %v289 = vsel %vm277, %v246, %v207
    %v291 = vsel %vm277, %v249, %v209
    %v293 = vsel %vm277, %v252, %v211
    %v295 = vsel %vm277, %v255, %v213
    %v297 = vsel %vm277, %v258, %v215
    %v299 = vsel %vm277, %v261, %v217
    %v301 = vsel %vm277, %v264, %v219
    %v303 = vsel %vm277, %v267, %v221
    %v305 = vsel %vm277, %v270, %v223
    %v307 = vsel %vm277, %v273, %v225
    %v309 = vsel %vm277, %v276, %v227
    %v326 = vunpack.c.l.b16 %v279
    %v327 = vunpack.c.l.b16 %v197
    %v328 = vunpack.c.l.b16 %v281
    %v329 = vunpack.c.l.b16 %v199
    %v330 = vunpack.c.l.b16 %v283
    %v331 = vunpack.c.l.b16 %v201
    %v332 = vunpack.c.l.b16 %v285
    %v333 = vunpack.c.l.b16 %v203
    %v334 = vunpack.c.l.b16 %v287
    %v335 = vunpack.c.l.b16 %v205
    %v336 = vunpack.c.l.b16 %v289
    %v337 = vunpack.c.l.b16 %v207
    %v338 = vunpack.c.l.b16 %v291
    %v339 = vunpack.c.l.b16 %v209
    %v340 = vunpack.c.l.b16 %v293
    %v341 = vunpack.c.l.b16 %v211
    %v342 = vunpack.c.l.b16 %v295
    %v343 = vunpack.c.l.b16 %v213
    %v344 = vunpack.c.l.b16 %v297
    %v345 = vunpack.c.l.b16 %v215
    %v346 = vunpack.c.l.b16 %v299
    %v347 = vunpack.c.l.b16 %v217
    %v348 = vunpack.c.l.b16 %v301
    %v349 = vunpack.c.l.b16 %v219
    %v350 = vunpack.c.l.b16 %v303
    %v351 = vunpack.c.l.b16 %v221
    %v352 = vunpack.c.l.b16 %v305
    %v353 = vunpack.c.l.b16 %v223
    %v354 = vunpack.c.l.b16 %v307
    %v355 = vunpack.c.l.b16 %v225
    %v356 = vunpack.c.l.b16 %v309
    %v357 = vunpack.c.l.b16 %v227
    %v358 = vld [vmem:[#allocation2] sm:$0xf]
    %v359 = vld [vmem:[#allocation2 + $0x4] sm:$0xf]
    %v360 = vld [vmem:[#allocation2 + $0x8] sm:$0xf]
    %v361 = vld [vmem:[#allocation2 + $0xc] sm:$0xf]
    %v362 = vld [vmem:[#allocation2 + $0x10] sm:$0xf]
    %v363 = vld [vmem:[#allocation2 + $0x14] sm:$0xf]
    %v364 = vld [vmem:[#allocation2 + $0x18] sm:$0xf]
    %v365 = vld [vmem:[#allocation2 + $0x1c] sm:$0xf]
    %v366 = vld [vmem:[#allocation2 + $0x20] sm:$0xf]
    %v367 = vld [vmem:[#allocation2 + $0x24] sm:$0xf]
    %v368 = vld [vmem:[#allocation2 + $0x28] sm:$0xf]
    %v369 = vld [vmem:[#allocation2 + $0x2c] sm:$0xf]
    %v370 = vld [vmem:[#allocation2 + $0x30] sm:$0xf]
    %v371 = vld [vmem:[#allocation2 + $0x34] sm:$0xf]
    %v372 = vld [vmem:[#allocation2 + $0x38] sm:$0xf]
    %v373 = vld [vmem:[#allocation2 + $0x3c] sm:$0xf]
    %v374 = vld [vmem:[#allocation2 + $0x40] sm:$0xf]
    %v375 = vld [vmem:[#allocation2 + $0x44] sm:$0xf]
    %v376 = vld [vmem:[%s2] sm:$0x1]
    %v378 = vperm.slane %v376, 0
    %v380 = vpack.c.b16 %v328, %v326
    %v381 = vpack.c.b16 %v329, %v327
    %v382 = vpack.c.b16 %v332, %v330
    %v383 = vpack.c.b16 %v333, %v331
    %v384 = vpack.c.b16 %v336, %v334
    %v385 = vpack.c.b16 %v337, %v335
    %v386 = vpack.c.b16 %v340, %v338
    %v387 = vpack.c.b16 %v341, %v339
    %v388 = vpack.c.b16 %v344, %v342
    %v389 = vpack.c.b16 %v345, %v343
    %v390 = vpack.c.b16 %v348, %v346
    %v391 = vpack.c.b16 %v349, %v347
    %v392 = vpack.c.b16 %v352, %v350
    %v393 = vpack.c.b16 %v353, %v351
    %v394 = vpack.c.b16 %v356, %v354
    %v395 = vpack.c.b16 %v357, %v355
    %v422 = vunpack.c.l.b16 %v358
    %v423 = vunpack.c.l.b16 %v359
    %v424 = vunpack.c.l.b16 %v360
    %v425 = vunpack.c.l.b16 %v361
    %v426 = vunpack.c.l.b16 %v362
    %v427 = vunpack.c.l.b16 %v363
    %v428 = vunpack.c.l.b16 %v364
    %v429 = vunpack.c.l.b16 %v365
    %v430 = vunpack.c.l.b16 %v366
    %v431 = vunpack.c.l.b16 %v367
    %v432 = vunpack.c.l.b16 %v368
    %v433 = vunpack.c.l.b16 %v369
    %v434 = vunpack.c.l.b16 %v370
    %v435 = vunpack.c.l.b16 %v371
    %v436 = vunpack.c.l.b16 %v372
    %v437 = vunpack.c.l.b16 %v373
    %v438 = vunpack.c.l.b16 %v374
    %v439 = vunpack.c.l.b16 %v375
    %v440 = vpack.c.b16 %v423, %v422
    %v441 = vpack.c.b16 %v425, %v424
    %v442 = vpack.c.b16 %v427, %v426
    %v443 = vpack.c.b16 %v429, %v428
    %v444 = vpack.c.b16 %v431, %v430
    %v445 = vpack.c.b16 %v433, %v432
    %v446 = vpack.c.b16 %v435, %v434
    %v447 = vpack.c.b16 %v437, %v436
    %v448 = vpack.c.b16 %v439, %v438
    %vm458 = vcmask 130048
    %v460 = vsel %vm458, %v381, 0
    %v463 = vsel %vm458, %v383, 0
    %v466 = vsel %vm458, %v385, 0
    %v469 = vsel %vm458, %v387, 0
    %v472 = vsel %vm458, %v389, 0
    %v475 = vsel %vm458, %v391, 0
    %v478 = vsel %vm458, %v393, 0
    %v481 = vsel %vm458, %v395, 0
    %483 = vmatpush.bf16.msra.mxu0 %v447
    %484 = vmatpush.bf16.msra.mxu0 %v446
    %485 = vmatpush.bf16.msra.mxu0 %v445
    %486 = vmatpush.bf16.msra.mxu0 %v444
    %487 = vmatpush.bf16.msra.mxu0 %v443
    %488 = vmatpush.bf16.msra.mxu0 %v442
    %489 = vmatpush.bf16.msra.mxu0 %v441
    %490 = vmatpush.bf16.msra.mxu0 %v440
    %491 = vmatmul.bf16.gmra.mxu0 %v380
    %v492 = vpop.f32.mrf.mxu0
    %v493 = vadd.f32 %v378, %v492
    %v494 = vpop.f32.mrf.mxu0
    %v495 = vadd.f32 %v378, %v494
    %496 = vmatmul.bf16.gmra.mxu0 %v382
    %v497 = vpop.f32.mrf.mxu0
    %v498 = vadd.f32 %v378, %v497
    %v499 = vpop.f32.mrf.mxu0
    %v500 = vadd.f32 %v378, %v499
    %501 = vmatmul.bf16.gmra.mxu0 %v384
    %v502 = vpop.f32.mrf.mxu0
    %v503 = vadd.f32 %v378, %v502
    %v504 = vpop.f32.mrf.mxu0
    %v505 = vadd.f32 %v378, %v504
    %506 = vmatmul.bf16.gmra.mxu0 %v386
    %v507 = vpop.f32.mrf.mxu0
    %v508 = vadd.f32 %v378, %v507
    %v509 = vpop.f32.mrf.mxu0
    %v510 = vadd.f32 %v378, %v509
    %511 = vmatmul.bf16.gmra.mxu0 %v388
    %v512 = vpop.f32.mrf.mxu0
    %v513 = vadd.f32 %v378, %v512
    %v514 = vpop.f32.mrf.mxu0
    %v515 = vadd.f32 %v378, %v514
    %516 = vmatmul.bf16.gmra.mxu0 %v390
    %v517 = vpop.f32.mrf.mxu0
    %v518 = vadd.f32 %v378, %v517
    %v519 = vpop.f32.mrf.mxu0
    %v520 = vadd.f32 %v378, %v519
    %521 = vmatmul.bf16.gmra.mxu0 %v392
    %v522 = vpop.f32.mrf.mxu0
    %v523 = vadd.f32 %v378, %v522
    %v524 = vpop.f32.mrf.mxu0
    %v525 = vadd.f32 %v378, %v524
    %526 = vmatmul.bf16.gmra.mxu0 %v394
    %v527 = vpop.f32.mrf.mxu0
    %v528 = vadd.f32 %v378, %v527
    %v529 = vpop.f32.mrf.mxu0
    %v530 = vadd.f32 %v378, %v529
    %531 = vdwg.mxu0
    %532 = vmatpush.bf16.msra.mxu0 0
    %533 = vmatpush.bf16.msra.mxu0 0
    %534 = vmatpush.bf16.msra.mxu0 0
    %535 = vmatpush.bf16.msra.mxu0 0
    %536 = vmatpush.bf16.msra.mxu0 0
    %537 = vmatpush.bf16.msra.mxu0 0
    %538 = vmatpush.bf16.msra.mxu0 0
    %539 = vmatpush.bf16.msra.mxu0 %v448
    %540 = vmatmul.bf16.gmra.mxu0 %v460
    %v541 = vpop.f32.mrf.mxu0
    %v542 = vadd.f32 %v493, %v541
    %v543 = vpop.f32.mrf.mxu0
    %v544 = vadd.f32 %v495, %v543
    %545 = vmatmul.bf16.gmra.mxu0 %v463
    %v546 = vpop.f32.mrf.mxu0
    %v547 = vadd.f32 %v498, %v546
    %v548 = vpop.f32.mrf.mxu0
    %v549 = vadd.f32 %v500, %v548
    %550 = vmatmul.bf16.gmra.mxu0 %v466
    %v551 = vpop.f32.mrf.mxu0
    %v552 = vadd.f32 %v503, %v551
    %v553 = vpop.f32.mrf.mxu0
    %v554 = vadd.f32 %v505, %v553
    %555 = vmatmul.bf16.gmra.mxu0 %v469
    %v556 = vpop.f32.mrf.mxu0
    %v557 = vadd.f32 %v508, %v556
    %v558 = vpop.f32.mrf.mxu0
    %v559 = vadd.f32 %v510, %v558
    %560 = vmatmul.bf16.gmra.mxu0 %v472
    %v561 = vpop.f32.mrf.mxu0
    %v562 = vadd.f32 %v513, %v561
    %v563 = vpop.f32.mrf.mxu0
    %v564 = vadd.f32 %v515, %v563
    %565 = vmatmul.bf16.gmra.mxu0 %v475
    %v566 = vpop.f32.mrf.mxu0
    %v567 = vadd.f32 %v518, %v566
    %v568 = vpop.f32.mrf.mxu0
    %v569 = vadd.f32 %v520, %v568
    %570 = vmatmul.bf16.gmra.mxu0 %v478
    %v571 = vpop.f32.mrf.mxu0
    %v572 = vadd.f32 %v523, %v571
    %v573 = vpop.f32.mrf.mxu0
    %v574 = vadd.f32 %v525, %v573
    %575 = vmatmul.bf16.gmra.mxu0 %v481
    %v576 = vpop.f32.mrf.mxu0
    %v577 = vadd.f32 %v528, %v576
    %v578 = vpop.f32.mrf.mxu0
    %v579 = vadd.f32 %v530, %v578
    %580 = vdwg.mxu0
    %v581 = vmax.f32 %v542, 0.0
    %v582 = vmax.f32 %v544, 0.0
    %v583 = vmax.f32 %v547, 0.0
    %v584 = vmax.f32 %v549, 0.0
    %v585 = vmax.f32 %v552, 0.0
    %v586 = vmax.f32 %v554, 0.0
    %v587 = vmax.f32 %v557, 0.0
    %v588 = vmax.f32 %v559, 0.0
    %v589 = vmax.f32 %v562, 0.0
    %v590 = vmax.f32 %v564, 0.0
    %v591 = vmax.f32 %v567, 0.0
    %v592 = vmax.f32 %v569, 0.0
    %v593 = vmax.f32 %v572, 0.0
    %v594 = vmax.f32 %v574, 0.0
    %v595 = vmax.f32 %v577, 0.0
    %v596 = vmax.f32 %v579, 0.0
    %v597 = vpack.c.bf16 %v581, %v581
    %v598 = vpack.c.bf16 %v582, %v582
    %v599 = vpack.c.bf16 %v583, %v583
    %v600 = vpack.c.bf16 %v584, %v584
    %v601 = vpack.c.bf16 %v585, %v585
    %v602 = vpack.c.bf16 %v586, %v586
    %v603 = vpack.c.bf16 %v587, %v587
    %v604 = vpack.c.bf16 %v588, %v588
    %v605 = vpack.c.bf16 %v589, %v589
    %v606 = vpack.c.bf16 %v590, %v590
    %v607 = vpack.c.bf16 %v591, %v591
    %v608 = vpack.c.bf16 %v592, %v592
    %v609 = vpack.c.bf16 %v593, %v593
    %v610 = vpack.c.bf16 %v594, %v594
    %v611 = vpack.c.bf16 %v595, %v595
    %v612 = vpack.c.bf16 %v596, %v596
    %v629 = vunpack.c.l.b16 0
    %v630 = vunpack.c.l.b16 %v597
    %v631 = vunpack.c.l.b16 %v598
    %v632 = vunpack.c.l.b16 %v599
    %v633 = vunpack.c.l.b16 %v600
    %v634 = vunpack.c.l.b16 %v601
    %v635 = vunpack.c.l.b16 %v602
    %v636 = vunpack.c.l.b16 %v603
    %v637 = vunpack.c.l.b16 %v604
    %v638 = vunpack.c.l.b16 %v605
    %v639 = vunpack.c.l.b16 %v606
    %v640 = vunpack.c.l.b16 %v607
    %v641 = vunpack.c.l.b16 %v608
    %v642 = vunpack.c.l.b16 %v609
    %v643 = vunpack.c.l.b16 %v610
    %v644 = vunpack.c.l.b16 %v611
    %v645 = vunpack.c.l.b16 %v612
    %v646 = vld [vmem:[%s3] sm:$0xf]
    %v647 = vld [vmem:[%s3 + $0x4] sm:$0xf]
    %v648 = vld [vmem:[%s3 + $0x8] sm:$0xf]
    %v649 = vld [vmem:[%s3 + $0xc] sm:$0xf]
    %v650 = vld [vmem:[%s3 + $0x10] sm:$0xf]
    %v651 = vld [vmem:[%s3 + $0x14] sm:$0xf]
    %v652 = vld [vmem:[%s3 + $0x18] sm:$0xf]
    %v653 = vld [vmem:[%s3 + $0x1c] sm:$0xf]
    %v654 = vld [vmem:[%s3 + $0x20] sm:$0xf]
    %v655 = vld [vmem:[%s3 + $0x24] sm:$0xf]
    %v656 = vld [vmem:[%s3 + $0x28] sm:$0xf]
    %v657 = vld [vmem:[%s3 + $0x2c] sm:$0xf]
    %v658 = vld [vmem:[%s3 + $0x30] sm:$0xf]
    %v659 = vld [vmem:[%s3 + $0x34] sm:$0xf]
    %v660 = vld [vmem:[%s3 + $0x38] sm:$0xf]
    %v661 = vld [vmem:[%s3 + $0x3c] sm:$0xf]
    %v662 = vld [vmem:[%s3 + $0x40] sm:$0xf]
    %v663 = vld [vmem:[%s3 + $0x44] sm:$0xf]
    %v664 = vld [vmem:[%s3 + $0x48] sm:$0xf]
    %v665 = vld [vmem:[%s3 + $0x4c] sm:$0xf]
    %v666 = vld [vmem:[%s3 + $0x50] sm:$0xf]
    %v667 = vld [vmem:[%s3 + $0x54] sm:$0xf]
    %v668 = vld [vmem:[%s3 + $0x58] sm:$0xf]
    %v669 = vld [vmem:[%s3 + $0x5c] sm:$0xf]
    %v670 = vld [vmem:[%s3 + $0x60] sm:$0xf]
    %v671 = vld [vmem:[%s3 + $0x64] sm:$0xf]
    %v672 = vld [vmem:[%s3 + $0x68] sm:$0xf]
    %v673 = vld [vmem:[%s3 + $0x6c] sm:$0xf]
    %v674 = vld [vmem:[%s3 + $0x70] sm:$0xf]
    %v675 = vld [vmem:[%s3 + $0x74] sm:$0xf]
    %v676 = vld [vmem:[%s3 + $0x78] sm:$0xf]
    %v677 = vld [vmem:[%s3 + $0x7c] sm:$0xf]
    %v678 = vld [vmem:[%s3 + $0x80] sm:$0xf]
    %v679 = vld [vmem:[%s3 + $0x84] sm:$0xf]
    %v680 = vld [vmem:[%s3 + $0x88] sm:$0xf]
    %v681 = vld [vmem:[%s3 + $0x8c] sm:$0xf]
    %v682 = vld [vmem:[%s3 + $0x90] sm:$0xf]
    %v683 = vld [vmem:[%s3 + $0x94] sm:$0xf]
    %v684 = vld [vmem:[%s3 + $0x98] sm:$0xf]
    %v685 = vld [vmem:[%s3 + $0x9c] sm:$0xf]
    %v686 = vld [vmem:[%s3 + $0xa0] sm:$0xf]
    %v687 = vld [vmem:[%s3 + $0xa4] sm:$0xf]
    %v688 = vld [vmem:[%s3 + $0xa8] sm:$0xf]
    %v689 = vld [vmem:[%s3 + $0xac] sm:$0xf]
    %v690 = vld [vmem:[%s3 + $0xb0] sm:$0xf]
    %v691 = vld [vmem:[%s3 + $0xb4] sm:$0xf]
    %v692 = vld [vmem:[%s3 + $0xb8] sm:$0xf]
    %v693 = vld [vmem:[%s3 + $0xbc] sm:$0xf]
    %v694 = vld [vmem:[%s4] sm:$0x1]
    %v696 = vperm.slane %v694, 0
    %v698 = vpack.c.b16 %v630, %v629
    %v699 = vpack.c.b16 %v631, %v630
    %v700 = vpack.c.b16 %v632, %v631
    %v701 = vpack.c.b16 %v633, %v632
    %v702 = vpack.c.b16 %v634, %v633
    %v703 = vpack.c.b16 %v635, %v634
    %v704 = vpack.c.b16 %v636, %v635
    %v705 = vpack.c.b16 %v637, %v636
    %v706 = vpack.c.b16 %v638, %v637
    %v707 = vpack.c.b16 %v639, %v638
    %v708 = vpack.c.b16 %v640, %v639
    %v709 = vpack.c.b16 %v641, %v640
    %v710 = vpack.c.b16 %v642, %v641
    %v711 = vpack.c.b16 %v643, %v642
    %v712 = vpack.c.b16 %v644, %v643
    %v713 = vpack.c.b16 %v645, %v644
    %v714 = vpack.c.b16 %v629, %v645
    %v780 = vunpack.c.l.b16 %v646
    %v781 = vunpack.c.l.b16 %v647
    %v782 = vunpack.c.l.b16 %v648
    %v783 = vunpack.c.l.b16 %v649
    %v784 = vunpack.c.l.b16 %v650
    %v785 = vunpack.c.l.b16 %v651
    %v786 = vunpack.c.l.b16 %v652
    %v787 = vunpack.c.l.b16 %v653
    %v788 = vunpack.c.l.b16 %v654
    %v789 = vunpack.c.l.b16 %v655
    %v790 = vunpack.c.l.b16 %v656
    %v791 = vunpack.c.l.b16 %v657
    %v792 = vunpack.c.l.b16 %v658
    %v793 = vunpack.c.l.b16 %v659
    %v794 = vunpack.c.l.b16 %v660
    %v795 = vunpack.c.l.b16 %v661
    %v796 = vunpack.c.l.b16 %v662
    %v797 = vunpack.c.l.b16 %v663
    %v798 = vunpack.c.l.b16 %v664
    %v799 = vunpack.c.l.b16 %v665
    %v800 = vunpack.c.l.b16 %v666
    %v801 = vunpack.c.l.b16 %v667
    %v802 = vunpack.c.l.b16 %v668
    %v803 = vunpack.c.l.b16 %v669
    %v804 = vunpack.c.l.b16 %v670
    %v805 = vunpack.c.l.b16 %v671
    %v806 = vunpack.c.l.b16 %v672
    %v807 = vunpack.c.l.b16 %v673
    %v808 = vunpack.c.l.b16 %v674
    %v809 = vunpack.c.l.b16 %v675
    %v810 = vunpack.c.l.b16 %v676
    %v811 = vunpack.c.l.b16 %v677
    %v812 = vunpack.c.l.b16 %v678
    %v813 = vunpack.c.l.b16 %v679
    %v814 = vunpack.c.l.b16 %v680
    %v815 = vunpack.c.l.b16 %v681
    %v816 = vunpack.c.l.b16 %v682
    %v817 = vunpack.c.l.b16 %v683
    %v818 = vunpack.c.l.b16 %v684
    %v819 = vunpack.c.l.b16 %v685
    %v820 = vunpack.c.l.b16 %v686
    %v821 = vunpack.c.l.b16 %v687
    %v822 = vunpack.c.l.b16 %v688
    %v823 = vunpack.c.l.b16 %v689
    %v824 = vunpack.c.l.b16 %v690
    %v825 = vunpack.c.l.b16 %v691
    %v826 = vunpack.c.l.b16 %v692
    %v827 = vunpack.c.l.b16 %v693
    %v828 = vpack.c.b16 %v781, %v780
    %v829 = vpack.c.b16 %v783, %v782
    %v830 = vpack.c.b16 %v785, %v784
    %v831 = vpack.c.b16 %v787, %v786
    %v832 = vpack.c.b16 %v789, %v788
    %v833 = vpack.c.b16 %v791, %v790
    %v834 = vpack.c.b16 %v793, %v792
    %v835 = vpack.c.b16 %v795, %v794
    %v836 = vpack.c.b16 %v797, %v796
    %v837 = vpack.c.b16 %v799, %v798
    %v838 = vpack.c.b16 %v801, %v800
    %v839 = vpack.c.b16 %v803, %v802
    %v840 = vpack.c.b16 %v805, %v804
    %v841 = vpack.c.b16 %v807, %v806
    %v842 = vpack.c.b16 %v809, %v808
    %v843 = vpack.c.b16 %v811, %v810
    %v844 = vpack.c.b16 %v813, %v812
    %v845 = vpack.c.b16 %v815, %v814
    %v846 = vpack.c.b16 %v817, %v816
    %v847 = vpack.c.b16 %v819, %v818
    %v848 = vpack.c.b16 %v821, %v820
    %v849 = vpack.c.b16 %v823, %v822
    %v850 = vpack.c.b16 %v825, %v824
    %v851 = vpack.c.b16 %v827, %v826
    %876 = vmatpush.bf16.msra.mxu0 %v835
    %877 = vmatpush.bf16.msra.mxu0 %v834
    %878 = vmatpush.bf16.msra.mxu0 %v833
    %879 = vmatpush.bf16.msra.mxu0 %v832
    %880 = vmatpush.bf16.msra.mxu0 %v831
    %881 = vmatpush.bf16.msra.mxu0 %v830
    %882 = vmatpush.bf16.msra.mxu0 %v829
    %883 = vmatpush.bf16.msra.mxu0 %v828
    %884 = vmatmul.bf16.gmra.mxu0 %v698
    %v885 = vpop.f32.mrf.mxu0
    %v886 = vadd.f32 %v696, %v885
    %v887 = vpop.f32.mrf.mxu0
    %v888 = vadd.f32 %v696, %v887
    %889 = vmatmul.bf16.gmra.mxu0 %v700
    %v890 = vpop.f32.mrf.mxu0
    %v891 = vadd.f32 %v696, %v890
    %v892 = vpop.f32.mrf.mxu0
    %v893 = vadd.f32 %v696, %v892
    %894 = vmatmul.bf16.gmra.mxu0 %v702
    %v895 = vpop.f32.mrf.mxu0
    %v896 = vadd.f32 %v696, %v895
    %v897 = vpop.f32.mrf.mxu0
    %v898 = vadd.f32 %v696, %v897
    %899 = vmatmul.bf16.gmra.mxu0 %v704
    %v900 = vpop.f32.mrf.mxu0
    %v901 = vadd.f32 %v696, %v900
    %v902 = vpop.f32.mrf.mxu0
    %v903 = vadd.f32 %v696, %v902
    %904 = vmatmul.bf16.gmra.mxu0 %v706
    %v905 = vpop.f32.mrf.mxu0
    %v906 = vadd.f32 %v696, %v905
    %v907 = vpop.f32.mrf.mxu0
    %v908 = vadd.f32 %v696, %v907
    %909 = vmatmul.bf16.gmra.mxu0 %v708
    %v910 = vpop.f32.mrf.mxu0
    %v911 = vadd.f32 %v696, %v910
    %v912 = vpop.f32.mrf.mxu0
    %v913 = vadd.f32 %v696, %v912
    %914 = vmatmul.bf16.gmra.mxu0 %v710
    %v915 = vpop.f32.mrf.mxu0
    %v916 = vadd.f32 %v696, %v915
    %v917 = vpop.f32.mrf.mxu0
    %v918 = vadd.f32 %v696, %v917
    %919 = vmatmul.bf16.gmra.mxu0 %v712
    %v920 = vpop.f32.mrf.mxu0
    %v921 = vadd.f32 %v696, %v920
    %v922 = vpop.f32.mrf.mxu0
    %v923 = vadd.f32 %v696, %v922
    %924 = vdwg.mxu0
    %925 = vmatpush.bf16.msra.mxu0 %v843
    %926 = vmatpush.bf16.msra.mxu0 %v842
    %927 = vmatpush.bf16.msra.mxu0 %v841
    %928 = vmatpush.bf16.msra.mxu0 %v840
    %929 = vmatpush.bf16.msra.mxu0 %v839
    %930 = vmatpush.bf16.msra.mxu0 %v838
    %931 = vmatpush.bf16.msra.mxu0 %v837
    %932 = vmatpush.bf16.msra.mxu0 %v836
    %933 = vmatmul.bf16.gmra.mxu0 %v699
    %v934 = vpop.f32.mrf.mxu0
    %v935 = vadd.f32 %v886, %v934
    %v936 = vpop.f32.mrf.mxu0
    %v937 = vadd.f32 %v888, %v936
    %938 = vmatmul.bf16.gmra.mxu0 %v701
    %v939 = vpop.f32.mrf.mxu0
    %v940 = vadd.f32 %v891, %v939
    %v941 = vpop.f32.mrf.mxu0
    %v942 = vadd.f32 %v893, %v941
    %943 = vmatmul.bf16.gmra.mxu0 %v703
    %v944 = vpop.f32.mrf.mxu0
    %v945 = vadd.f32 %v896, %v944
    %v946 = vpop.f32.mrf.mxu0
    %v947 = vadd.f32 %v898, %v946
    %948 = vmatmul.bf16.gmra.mxu0 %v705
    %v949 = vpop.f32.mrf.mxu0
    %v950 = vadd.f32 %v901, %v949
    %v951 = vpop.f32.mrf.mxu0
    %v952 = vadd.f32 %v903, %v951
    %953 = vmatmul.bf16.gmra.mxu0 %v707
    %v954 = vpop.f32.mrf.mxu0
    %v955 = vadd.f32 %v906, %v954
    %v956 = vpop.f32.mrf.mxu0
    %v957 = vadd.f32 %v908, %v956
    %958 = vmatmul.bf16.gmra.mxu0 %v709
    %v959 = vpop.f32.mrf.mxu0
    %v960 = vadd.f32 %v911, %v959
    %v961 = vpop.f32.mrf.mxu0
    %v962 = vadd.f32 %v913, %v961
    %963 = vmatmul.bf16.gmra.mxu0 %v711
    %v964 = vpop.f32.mrf.mxu0
    %v965 = vadd.f32 %v916, %v964
    %v966 = vpop.f32.mrf.mxu0
    %v967 = vadd.f32 %v918, %v966
    %968 = vmatmul.bf16.gmra.mxu0 %v713
    %v969 = vpop.f32.mrf.mxu0
    %v970 = vadd.f32 %v921, %v969
    %v971 = vpop.f32.mrf.mxu0
    %v972 = vadd.f32 %v923, %v971
    %973 = vdwg.mxu0
    %974 = vmatpush.bf16.msra.mxu0 %v851
    %975 = vmatpush.bf16.msra.mxu0 %v850
    %976 = vmatpush.bf16.msra.mxu0 %v849
    %977 = vmatpush.bf16.msra.mxu0 %v848
    %978 = vmatpush.bf16.msra.mxu0 %v847
    %979 = vmatpush.bf16.msra.mxu0 %v846
    %980 = vmatpush.bf16.msra.mxu0 %v845
    %981 = vmatpush.bf16.msra.mxu0 %v844
    %982 = vmatmul.bf16.gmra.mxu0 %v700
    %v983 = vpop.f32.mrf.mxu0
    %v984 = vadd.f32 %v935, %v983
    %v985 = vpop.f32.mrf.mxu0
    %v986 = vadd.f32 %v937, %v985
    %987 = vmatmul.bf16.gmra.mxu0 %v702
    %v988 = vpop.f32.mrf.mxu0
    %v989 = vadd.f32 %v940, %v988
    %v990 = vpop.f32.mrf.mxu0
    %v991 = vadd.f32 %v942, %v990
    %992 = vmatmul.bf16.gmra.mxu0 %v704
    %v993 = vpop.f32.mrf.mxu0
    %v994 = vadd.f32 %v945, %v993
    %v995 = vpop.f32.mrf.mxu0
    %v996 = vadd.f32 %v947, %v995
    %997 = vmatmul.bf16.gmra.mxu0 %v706
    %v998 = vpop.f32.mrf.mxu0
    %v999 = vadd.f32 %v950, %v998
    %v1000 = vpop.f32.mrf.mxu0
    %v1001 = vadd.f32 %v952, %v1000
    %1002 = vmatmul.bf16.gmra.mxu0 %v708
    %v1003 = vpop.f32.mrf.mxu0
    %v1004 = vadd.f32 %v955, %v1003
    %v1005 = vpop.f32.mrf.mxu0
    %v1006 = vadd.f32 %v957, %v1005
    %1007 = vmatmul.bf16.gmra.mxu0 %v710
    %v1008 = vpop.f32.mrf.mxu0
    %v1009 = vadd.f32 %v960, %v1008
    %v1010 = vpop.f32.mrf.mxu0
    %v1011 = vadd.f32 %v962, %v1010
    %1012 = vmatmul.bf16.gmra.mxu0 %v712
    %v1013 = vpop.f32.mrf.mxu0
    %v1014 = vadd.f32 %v965, %v1013
    %v1015 = vpop.f32.mrf.mxu0
    %v1016 = vadd.f32 %v967, %v1015
    %1017 = vmatmul.bf16.gmra.mxu0 %v714
    %v1018 = vpop.f32.mrf.mxu0
    %v1019 = vadd.f32 %v970, %v1018
    %v1020 = vpop.f32.mrf.mxu0
    %v1021 = vadd.f32 %v972, %v1020
    %1022 = vdwg.mxu0
    %v1023 = vmax.f32 %v984, 0.0
    %v1024 = vmax.f32 %v986, 0.0
    %v1025 = vmax.f32 %v989, 0.0
    %v1026 = vmax.f32 %v991, 0.0
    %v1027 = vmax.f32 %v994, 0.0
    %v1028 = vmax.f32 %v996, 0.0
    %v1029 = vmax.f32 %v999, 0.0
    %v1030 = vmax.f32 %v1001, 0.0
    %v1031 = vmax.f32 %v1004, 0.0
    %v1032 = vmax.f32 %v1006, 0.0
    %v1033 = vmax.f32 %v1009, 0.0
    %v1034 = vmax.f32 %v1011, 0.0
    %v1035 = vmax.f32 %v1014, 0.0
    %v1036 = vmax.f32 %v1016, 0.0
    %v1037 = vmax.f32 %v1019, 0.0
    %v1038 = vmax.f32 %v1021, 0.0
    %v1039 = vpack.c.bf16 %v1023, %v1023
    %v1040 = vpack.c.bf16 %v1024, %v1024
    %v1041 = vpack.c.bf16 %v1025, %v1025
    %v1042 = vpack.c.bf16 %v1026, %v1026
    %v1043 = vpack.c.bf16 %v1027, %v1027
    %v1044 = vpack.c.bf16 %v1028, %v1028
    %v1045 = vpack.c.bf16 %v1029, %v1029
    %v1046 = vpack.c.bf16 %v1030, %v1030
    %v1047 = vpack.c.bf16 %v1031, %v1031
    %v1048 = vpack.c.bf16 %v1032, %v1032
    %v1049 = vpack.c.bf16 %v1033, %v1033
    %v1050 = vpack.c.bf16 %v1034, %v1034
    %v1051 = vpack.c.bf16 %v1035, %v1035
    %v1052 = vpack.c.bf16 %v1036, %v1036
    %v1053 = vpack.c.bf16 %v1037, %v1037
    %v1054 = vpack.c.bf16 %v1038, %v1038
    %1055 = vst [vmem:[%s11] sm:$0xf] %v1039
    %1056 = vst [vmem:[%s11 + $0x4] sm:$0xf] %v1040
    %1057 = vst [vmem:[%s11 + $0x8] sm:$0xf] %v1041
    %1058 = vst [vmem:[%s11 + $0xc] sm:$0xf] %v1042
    %1059 = vst [vmem:[%s11 + $0x10] sm:$0xf] %v1043
    %1060 = vst [vmem:[%s11 + $0x14] sm:$0xf] %v1044
    %1061 = vst [vmem:[%s11 + $0x18] sm:$0xf] %v1045
    %1062 = vst [vmem:[%s11 + $0x1c] sm:$0xf] %v1046
    %1063 = vst [vmem:[%s11 + $0x20] sm:$0xf] %v1047
    %1064 = vst [vmem:[%s11 + $0x24] sm:$0xf] %v1048
    %1065 = vst [vmem:[%s11 + $0x28] sm:$0xf] %v1049
    %1066 = vst [vmem:[%s11 + $0x2c] sm:$0xf] %v1050
    %1067 = vst [vmem:[%s11 + $0x30] sm:$0xf] %v1051
    %1068 = vst [vmem:[%s11 + $0x34] sm:$0xf] %v1052
    %1069 = vst [vmem:[%s11 + $0x38] sm:$0xf] %v1053
    %1070 = vst [vmem:[%s11 + $0x3c] sm:$0xf] %v1054
    %v1087 = vunpack.c.l.b16 %v1039
    %v1088 = vunpack.c.l.b16 %v1040
    %v1089 = vunpack.c.l.b16 %v1041
    %v1090 = vunpack.c.l.b16 %v1042
    %v1091 = vunpack.c.l.b16 %v1043
    %v1092 = vunpack.c.l.b16 %v1044
    %v1093 = vunpack.c.l.b16 %v1045
    %v1094 = vunpack.c.l.b16 %v1046
    %v1095 = vunpack.c.l.b16 %v1047
    %v1096 = vunpack.c.l.b16 %v1048
    %v1097 = vunpack.c.l.b16 %v1049
    %v1098 = vunpack.c.l.b16 %v1050
    %v1099 = vunpack.c.l.b16 %v1051
    %v1100 = vunpack.c.l.b16 %v1052
    %v1101 = vunpack.c.l.b16 %v1053
    %v1102 = vunpack.c.l.b16 %v1054
    %v1103 = vld [vmem:[%s5] sm:$0xf]
    %v1104 = vld [vmem:[%s5 + $0x4] sm:$0xf]
    %v1105 = vld [vmem:[%s5 + $0x8] sm:$0xf]
    %v1106 = vld [vmem:[%s5 + $0xc] sm:$0xf]
    %v1107 = vld [vmem:[%s5 + $0x10] sm:$0xf]
    %v1108 = vld [vmem:[%s5 + $0x14] sm:$0xf]
    %v1109 = vld [vmem:[%s5 + $0x18] sm:$0xf]
    %v1110 = vld [vmem:[%s5 + $0x1c] sm:$0xf]
    %v1111 = vld [vmem:[%s5 + $0x20] sm:$0xf]
    %v1112 = vld [vmem:[%s5 + $0x24] sm:$0xf]
    %v1113 = vld [vmem:[%s5 + $0x28] sm:$0xf]
    %v1114 = vld [vmem:[%s5 + $0x2c] sm:$0xf]
    %v1115 = vld [vmem:[%s5 + $0x30] sm:$0xf]
    %v1116 = vld [vmem:[%s5 + $0x34] sm:$0xf]
    %v1117 = vld [vmem:[%s5 + $0x38] sm:$0xf]
    %v1118 = vld [vmem:[%s5 + $0x3c] sm:$0xf]
    %v1119 = vld [vmem:[%s5 + $0x40] sm:$0xf]
    %v1120 = vld [vmem:[%s5 + $0x44] sm:$0xf]
    %v1121 = vld [vmem:[%s5 + $0x48] sm:$0xf]
    %v1122 = vld [vmem:[%s5 + $0x4c] sm:$0xf]
    %v1123 = vld [vmem:[%s5 + $0x50] sm:$0xf]
    %v1124 = vld [vmem:[%s5 + $0x54] sm:$0xf]
    %v1125 = vld [vmem:[%s5 + $0x58] sm:$0xf]
    %v1126 = vld [vmem:[%s5 + $0x5c] sm:$0xf]
    %v1127 = vld [vmem:[%s5 + $0x60] sm:$0xf]
    %v1128 = vld [vmem:[%s5 + $0x64] sm:$0xf]
    %v1129 = vld [vmem:[%s5 + $0x68] sm:$0xf]
    %v1130 = vld [vmem:[%s5 + $0x6c] sm:$0xf]
    %v1131 = vld [vmem:[%s5 + $0x70] sm:$0xf]
    %v1132 = vld [vmem:[%s5 + $0x74] sm:$0xf]
    %v1133 = vld [vmem:[%s5 + $0x78] sm:$0xf]
    %v1134 = vld [vmem:[%s5 + $0x7c] sm:$0xf]
    %v1135 = vld [vmem:[%s5 + $0x80] sm:$0xf]
    %v1136 = vld [vmem:[%s5 + $0x84] sm:$0xf]
    %v1137 = vld [vmem:[%s5 + $0x88] sm:$0xf]
    %v1138 = vld [vmem:[%s5 + $0x8c] sm:$0xf]
    %v1139 = vld [vmem:[%s5 + $0x90] sm:$0xf]
    %v1140 = vld [vmem:[%s5 + $0x94] sm:$0xf]
    %v1141 = vld [vmem:[%s5 + $0x98] sm:$0xf]
    %v1142 = vld [vmem:[%s5 + $0x9c] sm:$0xf]
    %v1143 = vld [vmem:[%s5 + $0xa0] sm:$0xf]
    %v1144 = vld [vmem:[%s5 + $0xa4] sm:$0xf]
    %v1145 = vld [vmem:[%s5 + $0xa8] sm:$0xf]
    %v1146 = vld [vmem:[%s5 + $0xac] sm:$0xf]
    %v1147 = vld [vmem:[%s5 + $0xb0] sm:$0xf]
    %v1148 = vld [vmem:[%s5 + $0xb4] sm:$0xf]
    %v1149 = vld [vmem:[%s5 + $0xb8] sm:$0xf]
    %v1150 = vld [vmem:[%s5 + $0xbc] sm:$0xf]
    %v1151 = vld [vmem:[#allocation4] sm:$0x1]
    %v1153 = vperm.slane %v1151, 0
    %v1155 = vpack.c.b16 %v1088, %v629
    %v1156 = vpack.c.b16 %v1089, %v1087
    %v1157 = vpack.c.b16 %v1090, %v1088
    %v1158 = vpack.c.b16 %v1092, %v1090
    %v1159 = vpack.c.b16 %v1093, %v1091
    %v1160 = vpack.c.b16 %v1094, %v1092
    %v1161 = vpack.c.b16 %v1096, %v1094
    %v1162 = vpack.c.b16 %v1097, %v1095
    %v1163 = vpack.c.b16 %v1098, %v1096
    %v1164 = vpack.c.b16 %v1100, %v1098
    %v1165 = vpack.c.b16 %v1101, %v1099
    %v1166 = vpack.c.b16 %v1102, %v1100
    %v1227 = vunpack.c.l.b16 %v1103
    %v1228 = vunpack.c.l.b16 %v1104
    %v1229 = vunpack.c.l.b16 %v1105
    %v1230 = vunpack.c.l.b16 %v1106
    %v1231 = vunpack.c.l.b16 %v1107
    %v1232 = vunpack.c.l.b16 %v1108
    %v1233 = vunpack.c.l.b16 %v1109
    %v1234 = vunpack.c.l.b16 %v1110
    %v1235 = vunpack.c.l.b16 %v1111
    %v1236 = vunpack.c.l.b16 %v1112
    %v1237 = vunpack.c.l.b16 %v1113
    %v1238 = vunpack.c.l.b16 %v1114
    %v1239 = vunpack.c.l.b16 %v1115
    %v1240 = vunpack.c.l.b16 %v1116
    %v1241 = vunpack.c.l.b16 %v1117
    %v1242 = vunpack.c.l.b16 %v1118
    %v1243 = vunpack.c.l.b16 %v1119
    %v1244 = vunpack.c.l.b16 %v1120
    %v1245 = vunpack.c.l.b16 %v1121
    %v1246 = vunpack.c.l.b16 %v1122
    %v1247 = vunpack.c.l.b16 %v1123
    %v1248 = vunpack.c.l.b16 %v1124
    %v1249 = vunpack.c.l.b16 %v1125
    %v1250 = vunpack.c.l.b16 %v1126
    %v1251 = vunpack.c.l.b16 %v1127
    %v1252 = vunpack.c.l.b16 %v1128
    %v1253 = vunpack.c.l.b16 %v1129
    %v1254 = vunpack.c.l.b16 %v1130
    %v1255 = vunpack.c.l.b16 %v1131
    %v1256 = vunpack.c.l.b16 %v1132
    %v1257 = vunpack.c.l.b16 %v1133
    %v1258 = vunpack.c.l.b16 %v1134
    %v1259 = vunpack.c.l.b16 %v1135
    %v1260 = vunpack.c.l.b16 %v1136
    %v1261 = vunpack.c.l.b16 %v1137
    %v1262 = vunpack.c.l.b16 %v1138
    %v1263 = vunpack.c.l.b16 %v1139
    %v1264 = vunpack.c.l.b16 %v1140
    %v1265 = vunpack.c.l.b16 %v1141
    %v1266 = vunpack.c.l.b16 %v1142
    %v1267 = vunpack.c.l.b16 %v1143
    %v1268 = vunpack.c.l.b16 %v1144
    %v1269 = vunpack.c.l.b16 %v1145
    %v1270 = vunpack.c.l.b16 %v1146
    %v1271 = vunpack.c.l.b16 %v1147
    %v1272 = vunpack.c.l.b16 %v1148
    %v1273 = vunpack.c.l.b16 %v1149
    %v1274 = vunpack.c.l.b16 %v1150
    %v1275 = vpack.c.b16 %v1228, %v1227
    %v1276 = vpack.c.b16 %v1230, %v1229
    %v1277 = vpack.c.b16 %v1232, %v1231
    %v1278 = vpack.c.b16 %v1234, %v1233
    %v1279 = vpack.c.b16 %v1236, %v1235
    %v1280 = vpack.c.b16 %v1238, %v1237
    %v1281 = vpack.c.b16 %v1240, %v1239
    %v1282 = vpack.c.b16 %v1242, %v1241
    %v1283 = vpack.c.b16 %v1244, %v1243
    %v1284 = vpack.c.b16 %v1246, %v1245
    %v1285 = vpack.c.b16 %v1248, %v1247
    %v1286 = vpack.c.b16 %v1250, %v1249
    %v1287 = vpack.c.b16 %v1252, %v1251
    %v1288 = vpack.c.b16 %v1254, %v1253
    %v1289 = vpack.c.b16 %v1256, %v1255
    %v1290 = vpack.c.b16 %v1258, %v1257
    %v1291 = vpack.c.b16 %v1260, %v1259
    %v1292 = vpack.c.b16 %v1262, %v1261
    %v1293 = vpack.c.b16 %v1264, %v1263
    %v1294 = vpack.c.b16 %v1266, %v1265
    %v1295 = vpack.c.b16 %v1268, %v1267
    %v1296 = vpack.c.b16 %v1270, %v1269
    %v1297 = vpack.c.b16 %v1272, %v1271
    %v1298 = vpack.c.b16 %v1274, %v1273
    %1323 = vmatpush.bf16.msra.mxu0 %v1282
    %1324 = vmatpush.bf16.msra.mxu0 %v1281
    %1325 = vmatpush.bf16.msra.mxu0 %v1280
    %1326 = vmatpush.bf16.msra.mxu0 %v1279
    %1327 = vmatpush.bf16.msra.mxu0 %v1278
    %1328 = vmatpush.bf16.msra.mxu0 %v1277
    %1329 = vmatpush.bf16.msra.mxu0 %v1276
    %1330 = vmatpush.bf16.msra.mxu0 %v1275
    %1331 = vmatmul.bf16.gmra.mxu0 %v1155
    %v1332 = vpop.f32.mrf.mxu0
    %v1333 = vadd.f32 %v1153, %v1332
    %v1334 = vpop.f32.mrf.mxu0
    %v1335 = vadd.f32 %v1153, %v1334
    %1336 = vmatmul.bf16.gmra.mxu0 %v1158
    %v1337 = vpop.f32.mrf.mxu0
    %v1338 = vadd.f32 %v1153, %v1337
    %v1339 = vpop.f32.mrf.mxu0
    %v1340 = vadd.f32 %v1153, %v1339
    %1341 = vmatmul.bf16.gmra.mxu0 %v1161
    %v1342 = vpop.f32.mrf.mxu0
    %v1343 = vadd.f32 %v1153, %v1342
    %v1344 = vpop.f32.mrf.mxu0
    %v1345 = vadd.f32 %v1153, %v1344
    %1346 = vmatmul.bf16.gmra.mxu0 %v1164
    %v1347 = vpop.f32.mrf.mxu0
    %v1348 = vadd.f32 %v1153, %v1347
    %v1349 = vpop.f32.mrf.mxu0
    %v1350 = vadd.f32 %v1153, %v1349
    %1351 = vdwg.mxu0
    %1352 = vmatpush.bf16.msra.mxu0 %v1290
    %1353 = vmatpush.bf16.msra.mxu0 %v1289
    %1354 = vmatpush.bf16.msra.mxu0 %v1288
    %1355 = vmatpush.bf16.msra.mxu0 %v1287
    %1356 = vmatpush.bf16.msra.mxu0 %v1286
    %1357 = vmatpush.bf16.msra.mxu0 %v1285
    %1358 = vmatpush.bf16.msra.mxu0 %v1284
    %1359 = vmatpush.bf16.msra.mxu0 %v1283
    %1360 = vmatmul.bf16.gmra.mxu0 %v1156
    %v1361 = vpop.f32.mrf.mxu0
    %v1362 = vadd.f32 %v1333, %v1361
    %v1363 = vpop.f32.mrf.mxu0
    %v1364 = vadd.f32 %v1335, %v1363
    %1365 = vmatmul.bf16.gmra.mxu0 %v1159
    %v1366 = vpop.f32.mrf.mxu0
    %v1367 = vadd.f32 %v1338, %v1366
    %v1368 = vpop.f32.mrf.mxu0
    %v1369 = vadd.f32 %v1340, %v1368
    %1370 = vmatmul.bf16.gmra.mxu0 %v1162
    %v1371 = vpop.f32.mrf.mxu0
    %v1372 = vadd.f32 %v1343, %v1371
    %v1373 = vpop.f32.mrf.mxu0
    %v1374 = vadd.f32 %v1345, %v1373
    %1375 = vmatmul.bf16.gmra.mxu0 %v1165
    %v1376 = vpop.f32.mrf.mxu0
    %v1377 = vadd.f32 %v1348, %v1376
    %v1378 = vpop.f32.mrf.mxu0
    %v1379 = vadd.f32 %v1350, %v1378
    %1380 = vdwg.mxu0
    %1381 = vmatpush.bf16.msra.mxu0 %v1298
    %1382 = vmatpush.bf16.msra.mxu0 %v1297
    %1383 = vmatpush.bf16.msra.mxu0 %v1296
    %1384 = vmatpush.bf16.msra.mxu0 %v1295
    %1385 = vmatpush.bf16.msra.mxu0 %v1294
    %1386 = vmatpush.bf16.msra.mxu0 %v1293
    %1387 = vmatpush.bf16.msra.mxu0 %v1292
    %1388 = vmatpush.bf16.msra.mxu0 %v1291
    %1389 = vmatmul.bf16.gmra.mxu0 %v1157
    %v1390 = vpop.f32.mrf.mxu0
    %v1391 = vadd.f32 %v1362, %v1390
    %v1392 = vpop.f32.mrf.mxu0
    %v1393 = vadd.f32 %v1364, %v1392
    %1394 = vmatmul.bf16.gmra.mxu0 %v1160
    %v1395 = vpop.f32.mrf.mxu0
    %v1396 = vadd.f32 %v1367, %v1395
    %v1397 = vpop.f32.mrf.mxu0
    %v1398 = vadd.f32 %v1369, %v1397
    %1399 = vmatmul.bf16.gmra.mxu0 %v1163
    %v1400 = vpop.f32.mrf.mxu0
    %v1401 = vadd.f32 %v1372, %v1400
    %v1402 = vpop.f32.mrf.mxu0
    %v1403 = vadd.f32 %v1374, %v1402
    %1404 = vmatmul.bf16.gmra.mxu0 %v1166
    %v1405 = vpop.f32.mrf.mxu0
    %v1406 = vadd.f32 %v1377, %v1405
    %v1407 = vpop.f32.mrf.mxu0
    %v1408 = vadd.f32 %v1379, %v1407
    %1409 = vdwg.mxu0
    %v1410 = vmax.f32 %v1391, 0.0
    %v1411 = vmax.f32 %v1393, 0.0
    %v1412 = vmax.f32 %v1396, 0.0
    %v1413 = vmax.f32 %v1398, 0.0
    %v1414 = vmax.f32 %v1401, 0.0
    %v1415 = vmax.f32 %v1403, 0.0
    %v1416 = vmax.f32 %v1406, 0.0
    %v1417 = vmax.f32 %v1408, 0.0
    %v1418 = vpack.c.bf16 %v1410, %v1410
    %v1419 = vpack.c.bf16 %v1411, %v1411
    %v1420 = vpack.c.bf16 %v1412, %v1412
    %v1421 = vpack.c.bf16 %v1413, %v1413
    %v1422 = vpack.c.bf16 %v1414, %v1414
    %v1423 = vpack.c.bf16 %v1415, %v1415
    %v1424 = vpack.c.bf16 %v1416, %v1416
    %v1425 = vpack.c.bf16 %v1417, %v1417
    %1426 = vst [vmem:[%s12] sm:$0xf] %v1418
    %1427 = vst [vmem:[%s12 + $0x4] sm:$0xf] %v1419
    %1428 = vst [vmem:[%s12 + $0x8] sm:$0xf] %v1420
    %1429 = vst [vmem:[%s12 + $0xc] sm:$0xf] %v1421
    %1430 = vst [vmem:[%s12 + $0x10] sm:$0xf] %v1422
    %1431 = vst [vmem:[%s12 + $0x14] sm:$0xf] %v1423
    %1432 = vst [vmem:[%s12 + $0x18] sm:$0xf] %v1424
    %1433 = vst [vmem:[%s12 + $0x1c] sm:$0xf] %v1425
    %v1442 = vunpack.c.l.b16 %v1418
    %v1443 = vunpack.c.l.b16 %v1419
    %v1444 = vunpack.c.l.b16 %v1420
    %v1445 = vunpack.c.l.b16 %v1421
    %v1446 = vunpack.c.l.b16 %v1422
    %v1447 = vunpack.c.l.b16 %v1423
    %v1448 = vunpack.c.l.b16 %v1424
    %v1449 = vunpack.c.l.b16 %v1425
    %v1450 = vld [vmem:[#allocation6] sm:$0xf]
    %v1451 = vld [vmem:[#allocation6 + $0x4] sm:$0xf]
    %v1452 = vld [vmem:[#allocation6 + $0x8] sm:$0xf]
    %v1453 = vld [vmem:[#allocation6 + $0xc] sm:$0xf]
    %v1454 = vld [vmem:[#allocation6 + $0x10] sm:$0xf]
    %v1455 = vld [vmem:[#allocation6 + $0x14] sm:$0xf]
    %v1456 = vld [vmem:[#allocation6 + $0x18] sm:$0xf]
    %v1457 = vld [vmem:[#allocation6 + $0x1c] sm:$0xf]
    %v1458 = vld [vmem:[#allocation6 + $0x20] sm:$0xf]
    %v1459 = vld [vmem:[#allocation6 + $0x24] sm:$0xf]
    %v1460 = vld [vmem:[#allocation6 + $0x28] sm:$0xf]
    %v1461 = vld [vmem:[#allocation6 + $0x2c] sm:$0xf]
    %v1462 = vld [vmem:[#allocation6 + $0x30] sm:$0xf]
    %v1463 = vld [vmem:[#allocation6 + $0x34] sm:$0xf]
    %v1464 = vld [vmem:[#allocation6 + $0x38] sm:$0xf]
    %v1465 = vld [vmem:[#allocation6 + $0x3c] sm:$0xf]
    %v1466 = vld [vmem:[#allocation6 + $0x40] sm:$0xf]
    %v1467 = vld [vmem:[#allocation6 + $0x44] sm:$0xf]
    %v1468 = vld [vmem:[#allocation6 + $0x48] sm:$0xf]
    %v1469 = vld [vmem:[#allocation6 + $0x4c] sm:$0xf]
    %v1470 = vld [vmem:[#allocation6 + $0x50] sm:$0xf]
    %v1471 = vld [vmem:[#allocation6 + $0x54] sm:$0xf]
    %v1472 = vld [vmem:[#allocation6 + $0x58] sm:$0xf]
    %v1473 = vld [vmem:[#allocation6 + $0x5c] sm:$0xf]
    %v1474 = vld [vmem:[#allocation6 + $0x60] sm:$0xf]
    %v1475 = vld [vmem:[#allocation6 + $0x64] sm:$0xf]
    %v1476 = vld [vmem:[#allocation6 + $0x68] sm:$0xf]
    %v1477 = vld [vmem:[#allocation6 + $0x6c] sm:$0xf]
    %v1478 = vld [vmem:[#allocation6 + $0x70] sm:$0xf]
    %v1479 = vld [vmem:[#allocation6 + $0x74] sm:$0xf]
    %v1480 = vld [vmem:[#allocation6 + $0x78] sm:$0xf]
    %v1481 = vld [vmem:[#allocation6 + $0x7c] sm:$0xf]
    %v1482 = vld [vmem:[#allocation6 + $0x80] sm:$0xf]
    %v1483 = vld [vmem:[#allocation6 + $0x84] sm:$0xf]
    %v1484 = vld [vmem:[#allocation6 + $0x88] sm:$0xf]
    %v1485 = vld [vmem:[#allocation6 + $0x8c] sm:$0xf]
    %v1486 = vld [vmem:[#allocation6 + $0x90] sm:$0xf]
    %v1487 = vld [vmem:[#allocation6 + $0x94] sm:$0xf]
    %v1488 = vld [vmem:[#allocation6 + $0x98] sm:$0xf]
    %v1489 = vld [vmem:[#allocation6 + $0x9c] sm:$0xf]
    %v1490 = vld [vmem:[#allocation6 + $0xa0] sm:$0xf]
    %v1491 = vld [vmem:[#allocation6 + $0xa4] sm:$0xf]
    %v1492 = vld [vmem:[#allocation6 + $0xa8] sm:$0xf]
    %v1493 = vld [vmem:[#allocation6 + $0xac] sm:$0xf]
    %v1494 = vld [vmem:[#allocation6 + $0xb0] sm:$0xf]
    %v1495 = vld [vmem:[#allocation6 + $0xb4] sm:$0xf]
    %v1496 = vld [vmem:[#allocation6 + $0xb8] sm:$0xf]
    %v1497 = vld [vmem:[#allocation6 + $0xbc] sm:$0xf]
    %v1498 = vld [vmem:[#allocation7] sm:$0x1]
    %v1500 = vperm.slane %v1498, 0
    %v1502 = vpack.c.b16 %v1443, %v629
    %v1503 = vpack.c.b16 %v1444, %v1442
    %v1504 = vpack.c.b16 %v1445, %v1443
    %v1505 = vpack.c.b16 %v1447, %v1445
    %v1506 = vpack.c.b16 %v1448, %v1446
    %v1507 = vpack.c.b16 %v1449, %v1447
    %v1562 = vunpack.c.l.b16 %v1450
    %v1563 = vunpack.c.l.b16 %v1451
    %v1564 = vunpack.c.l.b16 %v1452
    %v1565 = vunpack.c.l.b16 %v1453
    %v1566 = vunpack.c.l.b16 %v1454
    %v1567 = vunpack.c.l.b16 %v1455
    %v1568 = vunpack.c.l.b16 %v1456
    %v1569 = vunpack.c.l.b16 %v1457
    %v1570 = vunpack.c.l.b16 %v1458
    %v1571 = vunpack.c.l.b16 %v1459
    %v1572 = vunpack.c.l.b16 %v1460
    %v1573 = vunpack.c.l.b16 %v1461
    %v1574 = vunpack.c.l.b16 %v1462
    %v1575 = vunpack.c.l.b16 %v1463
    %v1576 = vunpack.c.l.b16 %v1464
    %v1577 = vunpack.c.l.b16 %v1465
    %v1578 = vunpack.c.l.b16 %v1466
    %v1579 = vunpack.c.l.b16 %v1467
    %v1580 = vunpack.c.l.b16 %v1468
    %v1581 = vunpack.c.l.b16 %v1469
    %v1582 = vunpack.c.l.b16 %v1470
    %v1583 = vunpack.c.l.b16 %v1471
    %v1584 = vunpack.c.l.b16 %v1472
    %v1585 = vunpack.c.l.b16 %v1473
    %v1586 = vunpack.c.l.b16 %v1474
    %v1587 = vunpack.c.l.b16 %v1475
    %v1588 = vunpack.c.l.b16 %v1476
    %v1589 = vunpack.c.l.b16 %v1477
    %v1590 = vunpack.c.l.b16 %v1478
    %v1591 = vunpack.c.l.b16 %v1479
    %v1592 = vunpack.c.l.b16 %v1480
    %v1593 = vunpack.c.l.b16 %v1481
    %v1594 = vunpack.c.l.b16 %v1482
    %v1595 = vunpack.c.l.b16 %v1483
    %v1596 = vunpack.c.l.b16 %v1484
    %v1597 = vunpack.c.l.b16 %v1485
    %v1598 = vunpack.c.l.b16 %v1486
    %v1599 = vunpack.c.l.b16 %v1487
    %v1600 = vunpack.c.l.b16 %v1488
    %v1601 = vunpack.c.l.b16 %v1489
    %v1602 = vunpack.c.l.b16 %v1490
    %v1603 = vunpack.c.l.b16 %v1491
    %v1604 = vunpack.c.l.b16 %v1492
    %v1605 = vunpack.c.l.b16 %v1493
    %v1606 = vunpack.c.l.b16 %v1494
    %v1607 = vunpack.c.l.b16 %v1495
    %v1608 = vunpack.c.l.b16 %v1496
    %v1609 = vunpack.c.l.b16 %v1497
    %v1610 = vpack.c.b16 %v1563, %v1562
    %v1611 = vpack.c.b16 %v1565, %v1564
    %v1612 = vpack.c.b16 %v1567, %v1566
    %v1613 = vpack.c.b16 %v1569, %v1568
    %v1614 = vpack.c.b16 %v1571, %v1570
    %v1615 = vpack.c.b16 %v1573, %v1572
    %v1616 = vpack.c.b16 %v1575, %v1574
    %v1617 = vpack.c.b16 %v1577, %v1576
    %v1618 = vpack.c.b16 %v1579, %v1578
    %v1619 = vpack.c.b16 %v1581, %v1580
    %v1620 = vpack.c.b16 %v1583, %v1582
    %v1621 = vpack.c.b16 %v1585, %v1584
    %v1622 = vpack.c.b16 %v1587, %v1586
    %v1623 = vpack.c.b16 %v1589, %v1588
    %v1624 = vpack.c.b16 %v1591, %v1590
    %v1625 = vpack.c.b16 %v1593, %v1592
    %v1626 = vpack.c.b16 %v1595, %v1594
    %v1627 = vpack.c.b16 %v1597, %v1596
    %v1628 = vpack.c.b16 %v1599, %v1598
    %v1629 = vpack.c.b16 %v1601, %v1600
    %v1630 = vpack.c.b16 %v1603, %v1602
    %v1631 = vpack.c.b16 %v1605, %v1604
    %v1632 = vpack.c.b16 %v1607, %v1606
    %v1633 = vpack.c.b16 %v1609, %v1608
    %1658 = vmatpush.bf16.msra.mxu0 %v1617
    %1659 = vmatpush.bf16.msra.mxu0 %v1616
    %1660 = vmatpush.bf16.msra.mxu0 %v1615
    %1661 = vmatpush.bf16.msra.mxu0 %v1614
    %1662 = vmatpush.bf16.msra.mxu0 %v1613
    %1663 = vmatpush.bf16.msra.mxu0 %v1612
    %1664 = vmatpush.bf16.msra.mxu0 %v1611
    %1665 = vmatpush.bf16.msra.mxu0 %v1610
    %1666 = vmatmul.bf16.gmra.mxu0 %v1502
    %v1667 = vpop.f32.mrf.mxu0
    %v1668 = vadd.f32 %v1500, %v1667
    %v1669 = vpop.f32.mrf.mxu0
    %v1670 = vadd.f32 %v1500, %v1669
    %1671 = vmatmul.bf16.gmra.mxu0 %v1505
    %v1672 = vpop.f32.mrf.mxu0
    %v1673 = vadd.f32 %v1500, %v1672
    %v1674 = vpop.f32.mrf.mxu0
    %v1675 = vadd.f32 %v1500, %v1674
    %1676 = vdwg.mxu0
    %1677 = vmatpush.bf16.msra.mxu0 %v1625
    %1678 = vmatpush.bf16.msra.mxu0 %v1624
    %1679 = vmatpush.bf16.msra.mxu0 %v1623
    %1680 = vmatpush.bf16.msra.mxu0 %v1622
    %1681 = vmatpush.bf16.msra.mxu0 %v1621
    %1682 = vmatpush.bf16.msra.mxu0 %v1620
    %1683 = vmatpush.bf16.msra.mxu0 %v1619
    %1684 = vmatpush.bf16.msra.mxu0 %v1618
    %1685 = vmatmul.bf16.gmra.mxu0 %v1503
    %v1686 = vpop.f32.mrf.mxu0
    %v1687 = vadd.f32 %v1668, %v1686
    %v1688 = vpop.f32.mrf.mxu0
    %v1689 = vadd.f32 %v1670, %v1688
    %1690 = vmatmul.bf16.gmra.mxu0 %v1506
    %v1691 = vpop.f32.mrf.mxu0
    %v1692 = vadd.f32 %v1673, %v1691
    %v1693 = vpop.f32.mrf.mxu0
    %v1694 = vadd.f32 %v1675, %v1693
    %1695 = vdwg.mxu0
    %1696 = vmatpush.bf16.msra.mxu0 %v1633
    %1697 = vmatpush.bf16.msra.mxu0 %v1632
    %1698 = vmatpush.bf16.msra.mxu0 %v1631
    %1699 = vmatpush.bf16.msra.mxu0 %v1630
    %1700 = vmatpush.bf16.msra.mxu0 %v1629
    %1701 = vmatpush.bf16.msra.mxu0 %v1628
    %1702 = vmatpush.bf16.msra.mxu0 %v1627
    %1703 = vmatpush.bf16.msra.mxu0 %v1626
    %1704 = vmatmul.bf16.gmra.mxu0 %v1504
    %v1705 = vpop.f32.mrf.mxu0
    %v1706 = vadd.f32 %v1687, %v1705
    %v1707 = vpop.f32.mrf.mxu0
    %v1708 = vadd.f32 %v1689, %v1707
    %1709 = vmatmul.bf16.gmra.mxu0 %v1507
    %v1710 = vpop.f32.mrf.mxu0
    %v1711 = vadd.f32 %v1692, %v1710
    %v1712 = vpop.f32.mrf.mxu0
    %v1713 = vadd.f32 %v1694, %v1712
    %1714 = vdwg.mxu0
    %v1715 = vmax.f32 %v1706, 0.0
    %v1716 = vmax.f32 %v1708, 0.0
    %v1717 = vmax.f32 %v1711, 0.0
    %v1718 = vmax.f32 %v1713, 0.0
    %v1719 = vpack.c.bf16 %v1715, %v1715
    %v1720 = vpack.c.bf16 %v1716, %v1716
    %v1721 = vpack.c.bf16 %v1717, %v1717
    %v1722 = vpack.c.bf16 %v1718, %v1718
    %1723 = vst [vmem:[%s13] sm:$0xf] %v1719
    %1724 = vst [vmem:[%s13 + $0x4] sm:$0xf] %v1720
    %1725 = vst [vmem:[%s13 + $0x8] sm:$0xf] %v1721
    %1726 = vst [vmem:[%s13 + $0xc] sm:$0xf] %v1722
    %v1731 = vunpack.c.l.b16 %v1719
    %v1732 = vunpack.c.l.b16 %v1720
    %v1733 = vunpack.c.l.b16 %v1721
    %v1734 = vunpack.c.l.b16 %v1722
    %v1735 = vld [vmem:[#allocation9] sm:$0xf]
    %v1736 = vld [vmem:[#allocation9 + $0x4] sm:$0xf]
    %v1737 = vld [vmem:[#allocation9 + $0x8] sm:$0xf]
    %v1738 = vld [vmem:[#allocation9 + $0xc] sm:$0xf]
    %v1739 = vld [vmem:[#allocation9 + $0x10] sm:$0xf]
    %v1740 = vld [vmem:[#allocation9 + $0x14] sm:$0xf]
    %v1741 = vld [vmem:[#allocation9 + $0x18] sm:$0xf]
    %v1742 = vld [vmem:[#allocation9 + $0x1c] sm:$0xf]
    %v1743 = vld [vmem:[#allocation9 + $0x20] sm:$0xf]
    %v1744 = vld [vmem:[#allocation9 + $0x24] sm:$0xf]
    %v1745 = vld [vmem:[#allocation9 + $0x28] sm:$0xf]
    %v1746 = vld [vmem:[#allocation9 + $0x2c] sm:$0xf]
    %v1747 = vld [vmem:[#allocation9 + $0x30] sm:$0xf]
    %v1748 = vld [vmem:[#allocation9 + $0x34] sm:$0xf]
    %v1749 = vld [vmem:[#allocation9 + $0x38] sm:$0xf]
    %v1750 = vld [vmem:[#allocation9 + $0x3c] sm:$0xf]
    %v1751 = vld [vmem:[#allocation9 + $0x40] sm:$0xf]
    %v1752 = vld [vmem:[#allocation9 + $0x44] sm:$0xf]
    %v1753 = vld [vmem:[#allocation9 + $0x48] sm:$0xf]
    %v1754 = vld [vmem:[#allocation9 + $0x4c] sm:$0xf]
    %v1755 = vld [vmem:[#allocation9 + $0x50] sm:$0xf]
    %v1756 = vld [vmem:[#allocation9 + $0x54] sm:$0xf]
    %v1757 = vld [vmem:[#allocation9 + $0x58] sm:$0xf]
    %v1758 = vld [vmem:[#allocation9 + $0x5c] sm:$0xf]
    %v1759 = vld [vmem:[#allocation9 + $0x60] sm:$0xf]
    %v1760 = vld [vmem:[#allocation9 + $0x64] sm:$0xf]
    %v1761 = vld [vmem:[#allocation9 + $0x68] sm:$0xf]
    %v1762 = vld [vmem:[#allocation9 + $0x6c] sm:$0xf]
    %v1763 = vld [vmem:[#allocation9 + $0x70] sm:$0xf]
    %v1764 = vld [vmem:[#allocation9 + $0x74] sm:$0xf]
    %v1765 = vld [vmem:[#allocation9 + $0x78] sm:$0xf]
    %v1766 = vld [vmem:[#allocation9 + $0x7c] sm:$0xf]
    %v1767 = vld [vmem:[#allocation9 + $0x80] sm:$0xf]
    %v1768 = vld [vmem:[#allocation9 + $0x84] sm:$0xf]
    %v1769 = vld [vmem:[#allocation9 + $0x88] sm:$0xf]
    %v1770 = vld [vmem:[#allocation9 + $0x8c] sm:$0xf]
    %v1771 = vld [vmem:[#allocation9 + $0x90] sm:$0xf]
    %v1772 = vld [vmem:[#allocation9 + $0x94] sm:$0xf]
    %v1773 = vld [vmem:[#allocation9 + $0x98] sm:$0xf]
    %v1774 = vld [vmem:[#allocation9 + $0x9c] sm:$0xf]
    %v1775 = vld [vmem:[#allocation9 + $0xa0] sm:$0xf]
    %v1776 = vld [vmem:[#allocation9 + $0xa4] sm:$0xf]
    %v1777 = vld [vmem:[#allocation9 + $0xa8] sm:$0xf]
    %v1778 = vld [vmem:[#allocation9 + $0xac] sm:$0xf]
    %v1779 = vld [vmem:[#allocation9 + $0xb0] sm:$0xf]
    %v1780 = vld [vmem:[#allocation9 + $0xb4] sm:$0xf]
    %v1781 = vld [vmem:[#allocation9 + $0xb8] sm:$0xf]
    %v1782 = vld [vmem:[#allocation9 + $0xbc] sm:$0xf]
    %v1783 = vld [vmem:[#allocation10] sm:$0x1]
    %v1785 = vperm.slane %v1783, 0
    %v1787 = vpack.c.b16 %v1732, %v629
    %v1788 = vpack.c.b16 %v1733, %v1731
    %v1789 = vpack.c.b16 %v1734, %v1732
    %v1841 = vunpack.c.l.b16 %v1735
    %v1842 = vunpack.c.l.b16 %v1736
    %v1843 = vunpack.c.l.b16 %v1737
    %v1844 = vunpack.c.l.b16 %v1738
    %v1845 = vunpack.c.l.b16 %v1739
    %v1846 = vunpack.c.l.b16 %v1740
    %v1847 = vunpack.c.l.b16 %v1741
    %v1848 = vunpack.c.l.b16 %v1742
    %v1849 = vunpack.c.l.b16 %v1743
    %v1850 = vunpack.c.l.b16 %v1744
    %v1851 = vunpack.c.l.b16 %v1745
    %v1852 = vunpack.c.l.b16 %v1746
    %v1853 = vunpack.c.l.b16 %v1747
    %v1854 = vunpack.c.l.b16 %v1748
    %v1855 = vunpack.c.l.b16 %v1749
    %v1856 = vunpack.c.l.b16 %v1750
    %v1857 = vunpack.c.l.b16 %v1751
    %v1858 = vunpack.c.l.b16 %v1752
    %v1859 = vunpack.c.l.b16 %v1753
    %v1860 = vunpack.c.l.b16 %v1754
    %v1861 = vunpack.c.l.b16 %v1755
    %v1862 = vunpack.c.l.b16 %v1756
    %v1863 = vunpack.c.l.b16 %v1757
    %v1864 = vunpack.c.l.b16 %v1758
    %v1865 = vunpack.c.l.b16 %v1759
    %v1866 = vunpack.c.l.b16 %v1760
    %v1867 = vunpack.c.l.b16 %v1761
    %v1868 = vunpack.c.l.b16 %v1762
    %v1869 = vunpack.c.l.b16 %v1763
    %v1870 = vunpack.c.l.b16 %v1764
    %v1871 = vunpack.c.l.b16 %v1765
    %v1872 = vunpack.c.l.b16 %v1766
    %v1873 = vunpack.c.l.b16 %v1767
    %v1874 = vunpack.c.l.b16 %v1768
    %v1875 = vunpack.c.l.b16 %v1769
    %v1876 = vunpack.c.l.b16 %v1770
    %v1877 = vunpack.c.l.b16 %v1771
    %v1878 = vunpack.c.l.b16 %v1772
    %v1879 = vunpack.c.l.b16 %v1773
    %v1880 = vunpack.c.l.b16 %v1774
    %v1881 = vunpack.c.l.b16 %v1775
    %v1882 = vunpack.c.l.b16 %v1776
    %v1883 = vunpack.c.l.b16 %v1777
    %v1884 = vunpack.c.l.b16 %v1778
    %v1885 = vunpack.c.l.b16 %v1779
    %v1886 = vunpack.c.l.b16 %v1780
    %v1887 = vunpack.c.l.b16 %v1781
    %v1888 = vunpack.c.l.b16 %v1782
    %v1889 = vpack.c.b16 %v1842, %v1841
    %v1890 = vpack.c.b16 %v1844, %v1843
    %v1891 = vpack.c.b16 %v1846, %v1845
    %v1892 = vpack.c.b16 %v1848, %v1847
    %v1893 = vpack.c.b16 %v1850, %v1849
    %v1894 = vpack.c.b16 %v1852, %v1851
    %v1895 = vpack.c.b16 %v1854, %v1853
    %v1896 = vpack.c.b16 %v1856, %v1855
    %v1897 = vpack.c.b16 %v1858, %v1857
    %v1898 = vpack.c.b16 %v1860, %v1859
    %v1899 = vpack.c.b16 %v1862, %v1861
    %v1900 = vpack.c.b16 %v1864, %v1863
    %v1901 = vpack.c.b16 %v1866, %v1865
    %v1902 = vpack.c.b16 %v1868, %v1867
    %v1903 = vpack.c.b16 %v1870, %v1869
    %v1904 = vpack.c.b16 %v1872, %v1871
    %v1905 = vpack.c.b16 %v1874, %v1873
    %v1906 = vpack.c.b16 %v1876, %v1875
    %v1907 = vpack.c.b16 %v1878, %v1877
    %v1908 = vpack.c.b16 %v1880, %v1879
    %v1909 = vpack.c.b16 %v1882, %v1881
    %v1910 = vpack.c.b16 %v1884, %v1883
    %v1911 = vpack.c.b16 %v1886, %v1885
    %v1912 = vpack.c.b16 %v1888, %v1887
    %1937 = vmatpush.bf16.msra.mxu0 %v1896
    %1938 = vmatpush.bf16.msra.mxu0 %v1895
    %1939 = vmatpush.bf16.msra.mxu0 %v1894
    %1940 = vmatpush.bf16.msra.mxu0 %v1893
    %1941 = vmatpush.bf16.msra.mxu0 %v1892
    %1942 = vmatpush.bf16.msra.mxu0 %v1891
    %1943 = vmatpush.bf16.msra.mxu0 %v1890
    %1944 = vmatpush.bf16.msra.mxu0 %v1889
    %1945 = vmatmul.bf16.gmra.mxu0 %v1787
    %v1946 = vpop.f32.mrf.mxu0
    %v1947 = vadd.f32 %v1785, %v1946
    %v1948 = vpop.f32.mrf.mxu0
    %v1949 = vadd.f32 %v1785, %v1948
    %1950 = vdwg.mxu0
    %1951 = vmatpush.bf16.msra.mxu0 %v1904
    %1952 = vmatpush.bf16.msra.mxu0 %v1903
    %1953 = vmatpush.bf16.msra.mxu0 %v1902
    %1954 = vmatpush.bf16.msra.mxu0 %v1901
    %1955 = vmatpush.bf16.msra.mxu0 %v1900
    %1956 = vmatpush.bf16.msra.mxu0 %v1899
    %1957 = vmatpush.bf16.msra.mxu0 %v1898
    %1958 = vmatpush.bf16.msra.mxu0 %v1897
    %1959 = vmatmul.bf16.gmra.mxu0 %v1788
    %v1960 = vpop.f32.mrf.mxu0
    %v1961 = vadd.f32 %v1947, %v1960
    %v1962 = vpop.f32.mrf.mxu0
    %v1963 = vadd.f32 %v1949, %v1962
    %1964 = vdwg.mxu0
    %1965 = vmatpush.bf16.msra.mxu0 %v1912
    %1966 = vmatpush.bf16.msra.mxu0 %v1911
    %1967 = vmatpush.bf16.msra.mxu0 %v1910
    %1968 = vmatpush.bf16.msra.mxu0 %v1909
    %1969 = vmatpush.bf16.msra.mxu0 %v1908
    %1970 = vmatpush.bf16.msra.mxu0 %v1907
    %1971 = vmatpush.bf16.msra.mxu0 %v1906
    %1972 = vmatpush.bf16.msra.mxu0 %v1905
    %1973 = vmatmul.bf16.gmra.mxu0 %v1789
    %v1974 = vpop.f32.mrf.mxu0
    %v1975 = vadd.f32 %v1961, %v1974
    %v1976 = vpop.f32.mrf.mxu0
    %v1977 = vadd.f32 %v1963, %v1976
    %1978 = vdwg.mxu0
    %v1979 = vmax.f32 %v1975, 0.0
    %v1980 = vmax.f32 %v1977, 0.0
    %v1981 = vpack.c.bf16 %v1979, %v1979
    %v1982 = vpack.c.bf16 %v1980, %v1980
    %1983 = vst [vmem:[%s14] sm:$0xf] %v1981
    %1984 = vst [vmem:[%s14 + $0x4] sm:$0xf] %v1982
    // Predicated region
    $region70: #{feature_extractor_forward.1} parent=1 // pred_check
      _
    $region71: #{feature_extractor_forward.1} parent=1 // pred_check_branch
      %1986 = sbr.rel (0) target = $region73
    $region72: #{feature_extractor_forward.1} parent=1 // pred_region
      _
    $region73: #{feature_extractor_forward.1} parent=1 // pred_fallthru
      _
    // Predicated region
    $region74: #{feature_extractor_forward.1} parent=1 // pred_check
      _
    $region75: #{feature_extractor_forward.1} parent=1 // pred_check_branch
      %1988 = sbr.rel (0) target = $region77
    $region76: #{feature_extractor_forward.1} parent=1 // pred_region
      _
    $region77: #{feature_extractor_forward.1} parent=1 // pred_fallthru
      _
    // Predicated region
    $region78: #{feature_extractor_forward.1} parent=1 // pred_check
      _
    $region79: #{feature_extractor_forward.1} parent=1 // pred_check_branch
      %1990 = sbr.rel (0) target = $region81
    $region80: #{feature_extractor_forward.1} parent=1 // pred_region
      _
    $region81: #{feature_extractor_forward.1} parent=1 // pred_fallthru
      _
    // Predicated region
    $region82: #{feature_extractor_forward.1} parent=1 // pred_check
      _
    $region83: #{feature_extractor_forward.1} parent=1 // pred_check_branch
      %1992 = sbr.rel (0) target = $region85
    $region84: #{feature_extractor_forward.1} parent=1 // pred_region
      _
    $region85: #{feature_extractor_forward.1} parent=1 // pred_fallthru
      _
    // Predicated region
    $region86: #{feature_extractor_forward.1} parent=1 // pred_check
      _
    $region87: #{feature_extractor_forward.1} parent=1 // pred_check_branch
      %1994 = sbr.rel (0) target = $region89
    $region88: #{feature_extractor_forward.1} parent=1 // pred_region
      _
    $region89: #{feature_extractor_forward.1} parent=1 // pred_fallthru
      _
    // Predicated region
    $region90: #{feature_extractor_forward.1} parent=1 // pred_check
      _
    $region91: #{feature_extractor_forward.1} parent=1 // pred_check_branch
      %1996 = sbr.rel (0) target = $region93
    $region92: #{feature_extractor_forward.1} parent=1 // pred_region
      _
    $region93: #{feature_extractor_forward.1} parent=1 // pred_fallthru
      _
    // Predicated region
    $region94: #{feature_extractor_forward.1} parent=1 // pred_check
      _
    $region95: #{feature_extractor_forward.1} parent=1 // pred_check_branch
      %1998 = sbr.rel (0) target = $region97
    $region96: #{feature_extractor_forward.1} parent=1 // pred_region
      _
    $region97: #{feature_extractor_forward.1} parent=1 // pred_fallthru
      _
    // Predicated region
    $region98: #{feature_extractor_forward.1} parent=1 // pred_check
      _
    $region99: #{feature_extractor_forward.1} parent=1 // pred_check_branch
      %2000 = sbr.rel (0) target = $region101
    $region100: #{feature_extractor_forward.1} parent=1 // pred_region
      _
    $region101: #{feature_extractor_forward.1} parent=1 // pred_fallthru
      _
    %2001 = vsyncpa [#allocation3], 1
    %2002 = vsyncpa [#allocation5], 1
    %2003 = vsyncpa [#allocation8], 1
    %2004 = vsyncpa [#allocation11], 1

</llo_original>
